<compile_context>
chip_gen: v7x
topology: tpu7x:2x2x1
jax: 0.10.0
libtpu: 0.0.40
codegen_flags: <defaults>
</compile_context>

<pallas_src>
import functools

import jax
import jax.numpy as jnp
from jax.experimental import pallas as pl
from jax.experimental.pallas import tpu as pltpu


def _attention_kernel(x_ref, wq_ref, wk_ref, wv_ref, wo_ref, bo_ref, o_ref, *,
                      heads):
    # x_ref: (N, D) for the current batch element (batch dim squeezed by BlockSpec).
    x = x_ref[...]                      # (N, D) f32
    n = x.shape[0]
    d_out = o_ref.shape[-1]             # lane-padded output width (static)

    y = jnp.zeros((n, d_out), jnp.float32)
    # TODO(synk): for very large num_patches, switch to flash-style KV tiling
    # (online softmax) so the (N, N) scores never fully materialize in VMEM.
    for h in range(heads):              # static unroll; heads is small
        # Per-head projections from pre-split weights (scale folded into wq).
        qh = jnp.dot(x, wq_ref[h], preferred_element_type=jnp.float32)   # (N, dh)
        kh = jnp.dot(x, wk_ref[h], preferred_element_type=jnp.float32)   # (N, dh)
        vh = jnp.dot(x, wv_ref[h], preferred_element_type=jnp.float32)   # (N, dh)

        # q @ k^T without materializing a transpose (NT dot_general).
        dots = jax.lax.dot_general(qh, kh, (((1,), (1,)), ((), ())),
                                   preferred_element_type=jnp.float32)   # (N, N)
        dots = jnp.maximum(dots, jnp.float32(0.0))       # ReLU before softmax
        m = jnp.max(dots, axis=-1, keepdims=True)
        e = jnp.exp(dots - m)
        attn = e * pl.reciprocal(jnp.sum(e, axis=-1, keepdims=True), approx=True)

        out_h = jnp.dot(attn, vh, preferred_element_type=jnp.float32)    # (N, dh)
        # concat-of-heads + output Linear, fused as a per-head accumulate.
        y = y + jnp.dot(out_h, wo_ref[h], preferred_element_type=jnp.float32)

    o_ref[...] = (y + bo_ref[...]).astype(o_ref.dtype)


def attention_forward(x, w_qkv, w_out, b_out, *, heads, dim_head):
    """x: (B, N, D); w_qkv: (D, 3*inner); w_out: (inner, D); b_out: (1, D)."""
    B, N, D = x.shape
    inner = heads * dim_head
    scale = dim_head ** (-0.5)

    # ---- host-side parameter prep (once, outside the kernel) ----
    def split_heads(w):                                    # (D, inner) -> (heads, D, dh)
        return w.reshape(D, heads, dim_head).transpose(1, 0, 2)

    wq = split_heads(w_qkv[:, 0 * inner:1 * inner] * scale)   # scale folded into Q
    wk = split_heads(w_qkv[:, 1 * inner:2 * inner])
    wv = split_heads(w_qkv[:, 2 * inner:3 * inner])

    # Lane-dense output: pad projection width to a multiple of 128 lanes so the
    # final store is an unmasked full-lane vst; padding cols are zero.
    d_pad = ((D + 127) // 128) * 128
    wo = jnp.pad(w_out, ((0, 0), (0, d_pad - D))).reshape(heads, dim_head, d_pad)
    bo = jnp.pad(b_out, ((0, 0), (0, d_pad - D)))

    kernel = functools.partial(_attention_kernel, heads=heads)

    y = pl.pallas_call(
        kernel,
        out_shape=jax.ShapeDtypeStruct((B, N, d_pad), x.dtype),
        grid=(B,),
        in_specs=[
            # One batch element per grid step; batch dim squeezed in the kernel.
            pl.BlockSpec((None, N, D), lambda b: (b, 0, 0)),
            # Weights: constant block index -> stay resident in VMEM across steps.
            pl.BlockSpec((heads, D, dim_head), lambda b: (0, 0, 0)),
            pl.BlockSpec((heads, D, dim_head), lambda b: (0, 0, 0)),
            pl.BlockSpec((heads, D, dim_head), lambda b: (0, 0, 0)),
            pl.BlockSpec((heads, dim_head, d_pad), lambda b: (0, 0, 0)),
            pl.BlockSpec((1, d_pad), lambda b: (0, 0)),
        ],
        out_specs=pl.BlockSpec((None, N, d_pad), lambda b: (b, 0, 0)),
        compiler_params=pltpu.CompilerParams(
            dimension_semantics=("parallel",)),
    )(x, wq, wk, wv, wo, bo)

    return y[:, :, :D]


def _reference(x, w_qkv, w_out, b_out, heads, dim_head):
    B, N, D = x.shape
    inner = heads * dim_head
    qkv = jnp.einsum('bnd,de->bne', x, w_qkv)
    q, k, v = jnp.split(qkv, 3, axis=-1)

    def split_heads(t):
        return t.reshape(B, N, heads, dim_head).transpose(0, 2, 1, 3)

    q, k, v = map(split_heads, (q, k, v))
    dots = jnp.einsum('bhid,bhjd->bhij', q, k) * (dim_head ** -0.5)
    dots = jnp.maximum(dots, 0.0)
    attn = jax.nn.softmax(dots, axis=-1)
    out = jnp.einsum('bhij,bhjd->bhid', attn, v)
    out = out.transpose(0, 2, 1, 3).reshape(B, N, inner)
    return jnp.einsum('bni,id->bnd', out, w_out) + b_out


if __name__ == "__main__":
    # Small shapes consistent with the module's forward.
    B, N, D = 2, 8, 32          # batch, num_patches (seq), dim
    heads, dim_head = 4, 8      # inner_dim = 32
    inner = heads * dim_head

    key = jax.random.PRNGKey(0)
    k_x, k_qkv, k_out = jax.random.split(key, 3)

    x = jax.random.normal(k_x, (B, N, D), dtype=jnp.float32)

    # Deterministic xavier-normal-style init (torch Linear weight (out,in) is
    # stored here transposed as (in,out)); biases = 0 per init_weights.
    std_qkv = (2.0 / (D + 3 * inner)) ** 0.5
    w_qkv = std_qkv * jax.random.normal(k_qkv, (D, 3 * inner), dtype=jnp.float32)
    std_out = (2.0 / (inner + D)) ** 0.5
    w_out = std_out * jax.random.normal(k_out, (inner, D), dtype=jnp.float32)
    b_out = jnp.zeros((1, D), dtype=jnp.float32)

    y = attention_forward(x, w_qkv, w_out, b_out, heads=heads, dim_head=dim_head)
    y = jax.block_until_ready(y)

    y_ref = _reference(x, w_qkv, w_out, b_out, heads, dim_head)
    assert y.shape == (B, N, D)
    # Tolerance leaves headroom for the EUP approximate reciprocal used in the
    # softmax normalization; all matmuls accumulate in exact f32 on the MXU.
    assert jnp.allclose(y, y_ref, atol=2e-3, rtol=2e-3), "mismatch vs reference"

    print("KERNEL_OK")
</pallas_src>

<mosaic_0001>
module attributes {stable_mosaic.version = 11 : i64} {
  func.func @_attention_kernel(%arg0: i32, %arg1: memref<1x8x32xf32, #tpu.memory_space<vmem>>, %arg2: memref<4x32x8xf32, #tpu.memory_space<vmem>>, %arg3: memref<4x32x8xf32, #tpu.memory_space<vmem>>, %arg4: memref<4x32x8xf32, #tpu.memory_space<vmem>>, %arg5: memref<4x8x128xf32, #tpu.memory_space<vmem>>, %arg6: memref<1x128xf32, #tpu.memory_space<vmem>>, %arg7: memref<1x8x128xf32, #tpu.memory_space<vmem>>) attributes {dimension_semantics = [#tpu.dimension_semantics<parallel>], iteration_bounds = array<i64: 2>, scalar_prefetch = 0 : i64, scratch_operands = 0 : i64, tpu.core_type = #tpu.core_type<tc>, window_params = [{transform_indices = @transform_0, window_bounds = array<i64: 1, 8, 32>}, {pipeline_mode = #tpu.pipeline_mode<synchronous>, transform_indices = @transform_1, window_bounds = array<i64: 4, 32, 8>}, {pipeline_mode = #tpu.pipeline_mode<synchronous>, transform_indices = @transform_2, window_bounds = array<i64: 4, 32, 8>}, {pipeline_mode = #tpu.pipeline_mode<synchronous>, transform_indices = @transform_3, window_bounds = array<i64: 4, 32, 8>}, {pipeline_mode = #tpu.pipeline_mode<synchronous>, transform_indices = @transform_4, window_bounds = array<i64: 4, 8, 128>}, {pipeline_mode = #tpu.pipeline_mode<synchronous>, transform_indices = @transform_5, window_bounds = array<i64: 1, 128>}, {transform_indices = @transform_6, window_bounds = array<i64: 1, 8, 128>}]} {
    %c0 = arith.constant 0 : index
    %c0_0 = arith.constant 0 : index
    %c0_1 = arith.constant 0 : index
    %0 = vector.load %arg1[%c0, %c0_0, %c0_1] : memref<1x8x32xf32, #tpu.memory_space<vmem>>, vector<1x8x32xf32>
    %1 = vector.shape_cast %0 : vector<1x8x32xf32> to vector<8x32xf32>
    %cst = arith.constant 0.000000e+00 : f32
    %2 = vector.broadcast %cst : f32 to vector<8x128xf32>
    %c0_2 = arith.constant 0 : index
    %c0_3 = arith.constant 0 : index
    %c0_4 = arith.constant 0 : index
    %3 = vector.load %arg2[%c0_2, %c0_3, %c0_4] : memref<4x32x8xf32, #tpu.memory_space<vmem>>, vector<1x32x8xf32>
    %4 = vector.shape_cast %3 : vector<1x32x8xf32> to vector<32x8xf32>
    %cst_5 = arith.constant dense<0.000000e+00> : vector<8x8xf32>
    %5 = tpu.matmul %1, %4, %cst_5 {dimension_numbers = #tpu.dot_dimension_numbers<[1], [0], [0], [1], [0, 0, 1, 1], [], []>} : vector<8x32xf32>, vector<32x8xf32>, vector<8x8xf32> -> vector<8x8xf32>
    %c0_6 = arith.constant 0 : index
    %c0_7 = arith.constant 0 : index
    %c0_8 = arith.constant 0 : index
    %6 = vector.load %arg3[%c0_6, %c0_7, %c0_8] : memref<4x32x8xf32, #tpu.memory_space<vmem>>, vector<1x32x8xf32>
    %7 = vector.shape_cast %6 : vector<1x32x8xf32> to vector<32x8xf32>
    %cst_9 = arith.constant dense<0.000000e+00> : vector<8x8xf32>
    %8 = tpu.matmul %1, %7, %cst_9 {dimension_numbers = #tpu.dot_dimension_numbers<[1], [0], [0], [1], [0, 0, 1, 1], [], []>} : vector<8x32xf32>, vector<32x8xf32>, vector<8x8xf32> -> vector<8x8xf32>
    %c0_10 = arith.constant 0 : index
    %c0_11 = arith.constant 0 : index
    %c0_12 = arith.constant 0 : index
    %9 = vector.load %arg4[%c0_10, %c0_11, %c0_12] : memref<4x32x8xf32, #tpu.memory_space<vmem>>, vector<1x32x8xf32>
    %10 = vector.shape_cast %9 : vector<1x32x8xf32> to vector<32x8xf32>
    %cst_13 = arith.constant dense<0.000000e+00> : vector<8x8xf32>
    %11 = tpu.matmul %1, %10, %cst_13 {dimension_numbers = #tpu.dot_dimension_numbers<[1], [0], [0], [1], [0, 0, 1, 1], [], []>} : vector<8x32xf32>, vector<32x8xf32>, vector<8x8xf32> -> vector<8x8xf32>
    %cst_14 = arith.constant dense<0.000000e+00> : vector<8x8xf32>
    %12 = tpu.matmul %5, %8, %cst_14 {dimension_numbers = #tpu.dot_dimension_numbers<[1], [1], [0], [0], [0, 0, 1, 0], [], []>} : vector<8x8xf32>, vector<8x8xf32>, vector<8x8xf32> -> vector<8x8xf32>
    %cst_15 = arith.constant 0.000000e+00 : f32
    %13 = vector.broadcast %cst_15 : f32 to vector<8x8xf32>
    %14 = arith.maximumf %12, %13 : vector<8x8xf32>
    %cst_16 = arith.constant dense<0xFF800000> : vector<8xf32>
    %15 = vector.multi_reduction <maximumf>, %14, %cst_16 [1] : vector<8x8xf32> to vector<8xf32>
    %16 = vector.shape_cast %15 : vector<8xf32> to vector<8x1xf32>
    %17 = vector.broadcast %16 : vector<8x1xf32> to vector<8x8xf32>
    %18 = arith.subf %14, %17 : vector<8x8xf32>
    %19 = math.exp %18 : vector<8x8xf32>
    %cst_17 = arith.constant dense<0.000000e+00> : vector<8xf32>
    %20 = vector.multi_reduction <add>, %19, %cst_17 [1] : vector<8x8xf32> to vector<8xf32>
    %21 = vector.shape_cast %20 : vector<8xf32> to vector<8x1xf32>
    %22 = tpu.reciprocal %21 {approx = true} : vector<8x1xf32> -> vector<8x1xf32>
    %23 = vector.broadcast %22 : vector<8x1xf32> to vector<8x8xf32>
    %24 = arith.mulf %19, %23 : vector<8x8xf32>
    %cst_18 = arith.constant dense<0.000000e+00> : vector<8x8xf32>
    %25 = tpu.matmul %24, %11, %cst_18 {dimension_numbers = #tpu.dot_dimension_numbers<[1], [0], [0], [1], [0, 0, 1, 1], [], []>} : vector<8x8xf32>, vector<8x8xf32>, vector<8x8xf32> -> vector<8x8xf32>
    %c0_19 = arith.constant 0 : index
    %c0_20 = arith.constant 0 : index
    %c0_21 = arith.constant 0 : index
    %26 = vector.load %arg5[%c0_19, %c0_20, %c0_21] : memref<4x8x128xf32, #tpu.memory_space<vmem>>, vector<1x8x128xf32>
    %27 = vector.shape_cast %26 : vector<1x8x128xf32> to vector<8x128xf32>
    %cst_22 = arith.constant dense<0.000000e+00> : vector<8x128xf32>
    %28 = tpu.matmul %25, %27, %cst_22 {dimension_numbers = #tpu.dot_dimension_numbers<[1], [0], [0], [1], [0, 0, 1, 1], [], []>} : vector<8x8xf32>, vector<8x128xf32>, vector<8x128xf32> -> vector<8x128xf32>
    %29 = arith.addf %2, %28 : vector<8x128xf32>
    %c1 = arith.constant 1 : index
    %c0_23 = arith.constant 0 : index
    %c0_24 = arith.constant 0 : index
    %30 = vector.load %arg2[%c1, %c0_23, %c0_24] : memref<4x32x8xf32, #tpu.memory_space<vmem>>, vector<1x32x8xf32>
    %31 = vector.shape_cast %30 : vector<1x32x8xf32> to vector<32x8xf32>
    %cst_25 = arith.constant dense<0.000000e+00> : vector<8x8xf32>
    %32 = tpu.matmul %1, %31, %cst_25 {dimension_numbers = #tpu.dot_dimension_numbers<[1], [0], [0], [1], [0, 0, 1, 1], [], []>} : vector<8x32xf32>, vector<32x8xf32>, vector<8x8xf32> -> vector<8x8xf32>
    %c1_26 = arith.constant 1 : index
    %c0_27 = arith.constant 0 : index
    %c0_28 = arith.constant 0 : index
    %33 = vector.load %arg3[%c1_26, %c0_27, %c0_28] : memref<4x32x8xf32, #tpu.memory_space<vmem>>, vector<1x32x8xf32>
    %34 = vector.shape_cast %33 : vector<1x32x8xf32> to vector<32x8xf32>
    %cst_29 = arith.constant dense<0.000000e+00> : vector<8x8xf32>
    %35 = tpu.matmul %1, %34, %cst_29 {dimension_numbers = #tpu.dot_dimension_numbers<[1], [0], [0], [1], [0, 0, 1, 1], [], []>} : vector<8x32xf32>, vector<32x8xf32>, vector<8x8xf32> -> vector<8x8xf32>
    %c1_30 = arith.constant 1 : index
    %c0_31 = arith.constant 0 : index
    %c0_32 = arith.constant 0 : index
    %36 = vector.load %arg4[%c1_30, %c0_31, %c0_32] : memref<4x32x8xf32, #tpu.memory_space<vmem>>, vector<1x32x8xf32>
    %37 = vector.shape_cast %36 : vector<1x32x8xf32> to vector<32x8xf32>
    %cst_33 = arith.constant dense<0.000000e+00> : vector<8x8xf32>
    %38 = tpu.matmul %1, %37, %cst_33 {dimension_numbers = #tpu.dot_dimension_numbers<[1], [0], [0], [1], [0, 0, 1, 1], [], []>} : vector<8x32xf32>, vector<32x8xf32>, vector<8x8xf32> -> vector<8x8xf32>
    %cst_34 = arith.constant dense<0.000000e+00> : vector<8x8xf32>
    %39 = tpu.matmul %32, %35, %cst_34 {dimension_numbers = #tpu.dot_dimension_numbers<[1], [1], [0], [0], [0, 0, 1, 0], [], []>} : vector<8x8xf32>, vector<8x8xf32>, vector<8x8xf32> -> vector<8x8xf32>
    %cst_35 = arith.constant 0.000000e+00 : f32
    %40 = vector.broadcast %cst_35 : f32 to vector<8x8xf32>
    %41 = arith.maximumf %39, %40 : vector<8x8xf32>
    %cst_36 = arith.constant dense<0xFF800000> : vector<8xf32>
    %42 = vector.multi_reduction <maximumf>, %41, %cst_36 [1] : vector<8x8xf32> to vector<8xf32>
    %43 = vector.shape_cast %42 : vector<8xf32> to vector<8x1xf32>
    %44 = vector.broadcast %43 : vector<8x1xf32> to vector<8x8xf32>
    %45 = arith.subf %41, %44 : vector<8x8xf32>
    %46 = math.exp %45 : vector<8x8xf32>
    %cst_37 = arith.constant dense<0.000000e+00> : vector<8xf32>
    %47 = vector.multi_reduction <add>, %46, %cst_37 [1] : vector<8x8xf32> to vector<8xf32>
    %48 = vector.shape_cast %47 : vector<8xf32> to vector<8x1xf32>
    %49 = tpu.reciprocal %48 {approx = true} : vector<8x1xf32> -> vector<8x1xf32>
    %50 = vector.broadcast %49 : vector<8x1xf32> to vector<8x8xf32>
    %51 = arith.mulf %46, %50 : vector<8x8xf32>
    %cst_38 = arith.constant dense<0.000000e+00> : vector<8x8xf32>
    %52 = tpu.matmul %51, %38, %cst_38 {dimension_numbers = #tpu.dot_dimension_numbers<[1], [0], [0], [1], [0, 0, 1, 1], [], []>} : vector<8x8xf32>, vector<8x8xf32>, vector<8x8xf32> -> vector<8x8xf32>
    %c1_39 = arith.constant 1 : index
    %c0_40 = arith.constant 0 : index
    %c0_41 = arith.constant 0 : index
    %53 = vector.load %arg5[%c1_39, %c0_40, %c0_41] : memref<4x8x128xf32, #tpu.memory_space<vmem>>, vector<1x8x128xf32>
    %54 = vector.shape_cast %53 : vector<1x8x128xf32> to vector<8x128xf32>
    %cst_42 = arith.constant dense<0.000000e+00> : vector<8x128xf32>
    %55 = tpu.matmul %52, %54, %cst_42 {dimension_numbers = #tpu.dot_dimension_numbers<[1], [0], [0], [1], [0, 0, 1, 1], [], []>} : vector<8x8xf32>, vector<8x128xf32>, vector<8x128xf32> -> vector<8x128xf32>
    %56 = arith.addf %29, %55 : vector<8x128xf32>
    %c2 = arith.constant 2 : index
    %c0_43 = arith.constant 0 : index
    %c0_44 = arith.constant 0 : index
    %57 = vector.load %arg2[%c2, %c0_43, %c0_44] : memref<4x32x8xf32, #tpu.memory_space<vmem>>, vector<1x32x8xf32>
    %58 = vector.shape_cast %57 : vector<1x32x8xf32> to vector<32x8xf32>
    %cst_45 = arith.constant dense<0.000000e+00> : vector<8x8xf32>
    %59 = tpu.matmul %1, %58, %cst_45 {dimension_numbers = #tpu.dot_dimension_numbers<[1], [0], [0], [1], [0, 0, 1, 1], [], []>} : vector<8x32xf32>, vector<32x8xf32>, vector<8x8xf32> -> vector<8x8xf32>
    %c2_46 = arith.constant 2 : index
    %c0_47 = arith.constant 0 : index
    %c0_48 = arith.constant 0 : index
    %60 = vector.load %arg3[%c2_46, %c0_47, %c0_48] : memref<4x32x8xf32, #tpu.memory_space<vmem>>, vector<1x32x8xf32>
    %61 = vector.shape_cast %60 : vector<1x32x8xf32> to vector<32x8xf32>
    %cst_49 = arith.constant dense<0.000000e+00> : vector<8x8xf32>
    %62 = tpu.matmul %1, %61, %cst_49 {dimension_numbers = #tpu.dot_dimension_numbers<[1], [0], [0], [1], [0, 0, 1, 1], [], []>} : vector<8x32xf32>, vector<32x8xf32>, vector<8x8xf32> -> vector<8x8xf32>
    %c2_50 = arith.constant 2 : index
    %c0_51 = arith.constant 0 : index
    %c0_52 = arith.constant 0 : index
    %63 = vector.load %arg4[%c2_50, %c0_51, %c0_52] : memref<4x32x8xf32, #tpu.memory_space<vmem>>, vector<1x32x8xf32>
    %64 = vector.shape_cast %63 : vector<1x32x8xf32> to vector<32x8xf32>
    %cst_53 = arith.constant dense<0.000000e+00> : vector<8x8xf32>
    %65 = tpu.matmul %1, %64, %cst_53 {dimension_numbers = #tpu.dot_dimension_numbers<[1], [0], [0], [1], [0, 0, 1, 1], [], []>} : vector<8x32xf32>, vector<32x8xf32>, vector<8x8xf32> -> vector<8x8xf32>
    %cst_54 = arith.constant dense<0.000000e+00> : vector<8x8xf32>
    %66 = tpu.matmul %59, %62, %cst_54 {dimension_numbers = #tpu.dot_dimension_numbers<[1], [1], [0], [0], [0, 0, 1, 0], [], []>} : vector<8x8xf32>, vector<8x8xf32>, vector<8x8xf32> -> vector<8x8xf32>
    %cst_55 = arith.constant 0.000000e+00 : f32
    %67 = vector.broadcast %cst_55 : f32 to vector<8x8xf32>
    %68 = arith.maximumf %66, %67 : vector<8x8xf32>
    %cst_56 = arith.constant dense<0xFF800000> : vector<8xf32>
    %69 = vector.multi_reduction <maximumf>, %68, %cst_56 [1] : vector<8x8xf32> to vector<8xf32>
    %70 = vector.shape_cast %69 : vector<8xf32> to vector<8x1xf32>
    %71 = vector.broadcast %70 : vector<8x1xf32> to vector<8x8xf32>
    %72 = arith.subf %68, %71 : vector<8x8xf32>
    %73 = math.exp %72 : vector<8x8xf32>
    %cst_57 = arith.constant dense<0.000000e+00> : vector<8xf32>
    %74 = vector.multi_reduction <add>, %73, %cst_57 [1] : vector<8x8xf32> to vector<8xf32>
    %75 = vector.shape_cast %74 : vector<8xf32> to vector<8x1xf32>
    %76 = tpu.reciprocal %75 {approx = true} : vector<8x1xf32> -> vector<8x1xf32>
    %77 = vector.broadcast %76 : vector<8x1xf32> to vector<8x8xf32>
    %78 = arith.mulf %73, %77 : vector<8x8xf32>
    %cst_58 = arith.constant dense<0.000000e+00> : vector<8x8xf32>
    %79 = tpu.matmul %78, %65, %cst_58 {dimension_numbers = #tpu.dot_dimension_numbers<[1], [0], [0], [1], [0, 0, 1, 1], [], []>} : vector<8x8xf32>, vector<8x8xf32>, vector<8x8xf32> -> vector<8x8xf32>
    %c2_59 = arith.constant 2 : index
    %c0_60 = arith.constant 0 : index
    %c0_61 = arith.constant 0 : index
    %80 = vector.load %arg5[%c2_59, %c0_60, %c0_61] : memref<4x8x128xf32, #tpu.memory_space<vmem>>, vector<1x8x128xf32>
    %81 = vector.shape_cast %80 : vector<1x8x128xf32> to vector<8x128xf32>
    %cst_62 = arith.constant dense<0.000000e+00> : vector<8x128xf32>
    %82 = tpu.matmul %79, %81, %cst_62 {dimension_numbers = #tpu.dot_dimension_numbers<[1], [0], [0], [1], [0, 0, 1, 1], [], []>} : vector<8x8xf32>, vector<8x128xf32>, vector<8x128xf32> -> vector<8x128xf32>
    %83 = arith.addf %56, %82 : vector<8x128xf32>
    %c3 = arith.constant 3 : index
    %c0_63 = arith.constant 0 : index
    %c0_64 = arith.constant 0 : index
    %84 = vector.load %arg2[%c3, %c0_63, %c0_64] : memref<4x32x8xf32, #tpu.memory_space<vmem>>, vector<1x32x8xf32>
    %85 = vector.shape_cast %84 : vector<1x32x8xf32> to vector<32x8xf32>
    %cst_65 = arith.constant dense<0.000000e+00> : vector<8x8xf32>
    %86 = tpu.matmul %1, %85, %cst_65 {dimension_numbers = #tpu.dot_dimension_numbers<[1], [0], [0], [1], [0, 0, 1, 1], [], []>} : vector<8x32xf32>, vector<32x8xf32>, vector<8x8xf32> -> vector<8x8xf32>
    %c3_66 = arith.constant 3 : index
    %c0_67 = arith.constant 0 : index
    %c0_68 = arith.constant 0 : index
    %87 = vector.load %arg3[%c3_66, %c0_67, %c0_68] : memref<4x32x8xf32, #tpu.memory_space<vmem>>, vector<1x32x8xf32>
    %88 = vector.shape_cast %87 : vector<1x32x8xf32> to vector<32x8xf32>
    %cst_69 = arith.constant dense<0.000000e+00> : vector<8x8xf32>
    %89 = tpu.matmul %1, %88, %cst_69 {dimension_numbers = #tpu.dot_dimension_numbers<[1], [0], [0], [1], [0, 0, 1, 1], [], []>} : vector<8x32xf32>, vector<32x8xf32>, vector<8x8xf32> -> vector<8x8xf32>
    %c3_70 = arith.constant 3 : index
    %c0_71 = arith.constant 0 : index
    %c0_72 = arith.constant 0 : index
    %90 = vector.load %arg4[%c3_70, %c0_71, %c0_72] : memref<4x32x8xf32, #tpu.memory_space<vmem>>, vector<1x32x8xf32>
    %91 = vector.shape_cast %90 : vector<1x32x8xf32> to vector<32x8xf32>
    %cst_73 = arith.constant dense<0.000000e+00> : vector<8x8xf32>
    %92 = tpu.matmul %1, %91, %cst_73 {dimension_numbers = #tpu.dot_dimension_numbers<[1], [0], [0], [1], [0, 0, 1, 1], [], []>} : vector<8x32xf32>, vector<32x8xf32>, vector<8x8xf32> -> vector<8x8xf32>
    %cst_74 = arith.constant dense<0.000000e+00> : vector<8x8xf32>
    %93 = tpu.matmul %86, %89, %cst_74 {dimension_numbers = #tpu.dot_dimension_numbers<[1], [1], [0], [0], [0, 0, 1, 0], [], []>} : vector<8x8xf32>, vector<8x8xf32>, vector<8x8xf32> -> vector<8x8xf32>
    %cst_75 = arith.constant 0.000000e+00 : f32
    %94 = vector.broadcast %cst_75 : f32 to vector<8x8xf32>
    %95 = arith.maximumf %93, %94 : vector<8x8xf32>
    %cst_76 = arith.constant dense<0xFF800000> : vector<8xf32>
    %96 = vector.multi_reduction <maximumf>, %95, %cst_76 [1] : vector<8x8xf32> to vector<8xf32>
    %97 = vector.shape_cast %96 : vector<8xf32> to vector<8x1xf32>
    %98 = vector.broadcast %97 : vector<8x1xf32> to vector<8x8xf32>
    %99 = arith.subf %95, %98 : vector<8x8xf32>
    %100 = math.exp %99 : vector<8x8xf32>
    %cst_77 = arith.constant dense<0.000000e+00> : vector<8xf32>
    %101 = vector.multi_reduction <add>, %100, %cst_77 [1] : vector<8x8xf32> to vector<8xf32>
    %102 = vector.shape_cast %101 : vector<8xf32> to vector<8x1xf32>
    %103 = tpu.reciprocal %102 {approx = true} : vector<8x1xf32> -> vector<8x1xf32>
    %104 = vector.broadcast %103 : vector<8x1xf32> to vector<8x8xf32>
    %105 = arith.mulf %100, %104 : vector<8x8xf32>
    %cst_78 = arith.constant dense<0.000000e+00> : vector<8x8xf32>
    %106 = tpu.matmul %105, %92, %cst_78 {dimension_numbers = #tpu.dot_dimension_numbers<[1], [0], [0], [1], [0, 0, 1, 1], [], []>} : vector<8x8xf32>, vector<8x8xf32>, vector<8x8xf32> -> vector<8x8xf32>
    %c3_79 = arith.constant 3 : index
    %c0_80 = arith.constant 0 : index
    %c0_81 = arith.constant 0 : index
    %107 = vector.load %arg5[%c3_79, %c0_80, %c0_81] : memref<4x8x128xf32, #tpu.memory_space<vmem>>, vector<1x8x128xf32>
    %108 = vector.shape_cast %107 : vector<1x8x128xf32> to vector<8x128xf32>
    %cst_82 = arith.constant dense<0.000000e+00> : vector<8x128xf32>
    %109 = tpu.matmul %106, %108, %cst_82 {dimension_numbers = #tpu.dot_dimension_numbers<[1], [0], [0], [1], [0, 0, 1, 1], [], []>} : vector<8x8xf32>, vector<8x128xf32>, vector<8x128xf32> -> vector<8x128xf32>
    %110 = arith.addf %83, %109 : vector<8x128xf32>
    %c0_83 = arith.constant 0 : index
    %c0_84 = arith.constant 0 : index
    %111 = vector.load %arg6[%c0_83, %c0_84] : memref<1x128xf32, #tpu.memory_space<vmem>>, vector<1x128xf32>
    %112 = vector.broadcast %111 : vector<1x128xf32> to vector<8x128xf32>
    %113 = arith.addf %110, %112 : vector<8x128xf32>
    %c0_85 = arith.constant 0 : index
    %c0_86 = arith.constant 0 : index
    %c0_87 = arith.constant 0 : index
    %114 = vector.load %arg7[%c0_85, %c0_86, %c0_87] : memref<1x8x128xf32, #tpu.memory_space<vmem>>, vector<1x8x128xf32>
    %115 = vector.shape_cast %114 : vector<1x8x128xf32> to vector<8x128xf32>
    %116 = vector.shape_cast %113 : vector<8x128xf32> to vector<1x8x128xf32>
    tpu.vector_store %arg7[%c0_85, %c0_86, %c0_87], %116 {strides = array<i32>} : memref<1x8x128xf32, #tpu.memory_space<vmem>>, vector<1x8x128xf32>,
    return
  }
  func.func @transform_0(%arg0: i32) -> (i32, i32, i32) {
    %c0_i32 = arith.constant 0 : i32
    %c0_i32_0 = arith.constant 0 : i32
    %c0_i32_1 = arith.constant 0 : i32
    return %arg0, %c0_i32, %c0_i32_0 : i32, i32, i32
  }
  func.func @transform_1(%arg0: i32) -> (i32, i32, i32) {
    %c0_i32 = arith.constant 0 : i32
    %c0_i32_0 = arith.constant 0 : i32
    %c0_i32_1 = arith.constant 0 : i32
    %c0_i32_2 = arith.constant 0 : i32
    return %c0_i32, %c0_i32_0, %c0_i32_1 : i32, i32, i32
  }
  func.func @transform_2(%arg0: i32) -> (i32, i32, i32) {
    %c0_i32 = arith.constant 0 : i32
    %c0_i32_0 = arith.constant 0 : i32
    %c0_i32_1 = arith.constant 0 : i32
    %c0_i32_2 = arith.constant 0 : i32
    return %c0_i32, %c0_i32_0, %c0_i32_1 : i32, i32, i32
  }
  func.func @transform_3(%arg0: i32) -> (i32, i32, i32) {
    %c0_i32 = arith.constant 0 : i32
    %c0_i32_0 = arith.constant 0 : i32
    %c0_i32_1 = arith.constant 0 : i32
    %c0_i32_2 = arith.constant 0 : i32
    return %c0_i32, %c0_i32_0, %c0_i32_1 : i32, i32, i32
  }
  func.func @transform_4(%arg0: i32) -> (i32, i32, i32) {
    %c0_i32 = arith.constant 0 : i32
    %c0_i32_0 = arith.constant 0 : i32
    %c0_i32_1 = arith.constant 0 : i32
    %c0_i32_2 = arith.constant 0 : i32
    return %c0_i32, %c0_i32_0, %c0_i32_1 : i32, i32, i32
  }
  func.func @transform_5(%arg0: i32) -> (i32, i32) {
    %c0_i32 = arith.constant 0 : i32
    %c0_i32_0 = arith.constant 0 : i32
    %c0_i32_1 = arith.constant 0 : i32
    return %c0_i32, %c0_i32_0 : i32, i32
  }
  func.func @transform_6(%arg0: i32) -> (i32, i32, i32) {
    %c0_i32 = arith.constant 0 : i32
    %c0_i32_0 = arith.constant 0 : i32
    %c0_i32_1 = arith.constant 0 : i32
    return %arg0, %c0_i32, %c0_i32_0 : i32, i32, i32
  }
}

</mosaic_0001>

<llo_original>
// kernel: tpu_custom_call.1
$region0: #{tpu_custom_call.1}
  #allocation0 [shape = 'u32[]', space=smem, size = 0x4, offset = 0x4, fixed_abs, tag = 'smem constant byte address 0x4 - core index']
  #allocation1 [shape = 'u32[144,128]{1,0:T(1,128)}', space=vmem, size = 0x12000, scoped, tag = 'internal scratch']
  %s0 = inlined_call_operand.vmem [shape: f32[2,8,32], index: 0, kind: input, shape index: {}]
  %s1 = inlined_call_operand.vmem [shape: f32[4,32,8], index: 1, kind: input, shape index: {}]
  %s2 = inlined_call_operand.vmem [shape: f32[4,32,8], index: 2, kind: input, shape index: {}]
  %s3 = inlined_call_operand.vmem [shape: f32[4,32,8], index: 3, kind: input, shape index: {}]
  %s4 = inlined_call_operand.vmem [shape: f32[4,8,128], index: 4, kind: input, shape index: {}]
  %s5 = inlined_call_operand.vmem [shape: f32[1,128], index: 5, kind: input, shape index: {}]
  %s6 = inlined_call_operand.hbm [shape: f32[2,8,128], index: 6, kind: output, shape index: {}]
  %s7 = sld [smem:[#allocation0]]
  $region57: #{tpu_custom_call.1} parent=0
    _
  %s9 = ssub.s32 1, %s7
  %s10 = scalar_select 0, %s9, %s7
  $region1: #{tpu_custom_call.1} parent=0
    #allocation2 [shape = 'u8[8192]{0}', space=vmem, size = 0x2000, scoped, tag = 'output window, operand 0']
    #allocation3 [shape = 's32[2]{0}', space=sflag, size = 0x8, scoped, tag = 'scoped memory for tpu_custom_call.1']
    %11 = vsyncpa [#allocation3], 0
    %s12 = scalar_lea.sflag [#allocation3], 1
    %13 = vsyncpa %s12, 0
    loop: start=0, step=1, limit=4
    $region2: #{tpu_custom_call.1} parent=1 // loop_pre_header
      _
    $region3: #{tpu_custom_call.1} parent=1 // loop_header
      %s15 = sphi 0, %s19
      %p16 = scmp.ge.s32.totalorder %s15, 4
      %s25 = sphi 0, %s27
      %s28 = sphi 0, %s25
      %s29 = sphi 0, %s28
      %s45 = sphi 0, %s29
      %s49 = sphi 0, %s49
      %s51 = sphi 0, %s49
      %s52 = sphi 0, %s51
      %s66 = sphi 0, %s52
      %s70 = sphi 0, %s70
      %s72 = sphi 0, %s70
      %s73 = sphi 0, %s72
      %s87 = sphi 0, %s73
      %s91 = sphi 0, %s91
      %s93 = sphi 0, %s91
      %s94 = sphi 0, %s93
      %s108 = sphi 0, %s94
      %s112 = sphi 0, %s112
      %s114 = sphi 0, %s112
      %s115 = sphi 0, %s114
      %s129 = sphi 0, %s115
      %s133 = sphi 0, %s133
      %s135 = sphi 0, %s133
      %s136 = sphi 0, %s135
      %s150 = sphi 0, %s136
      %s156 = sphi 0, %s158
      %s159 = sphi 0, %s156
      %s160 = sphi 0, %s159
      %s176 = sphi 0, %s160
    $region4: #{tpu_custom_call.1} parent=1 // loop_header_branch
      %18 = sbr.rel (%p16) target = $region8
    $region5: #{tpu_custom_call.1} parent=1 // loop_body
      %s20 = ssub.s32 %s15, 1
      %s21 = ssub.s32 %s15, 2
      %s22 = sadd.s32 %s15, 1
      %s23 = ssub.s32 %s15, %s22
      %p24 = scmp.eq.s32.totalorder %s23, 0
      %s26 = sadd.s32 %s25, 1
      %s27 = scalar_select %p24, %s25, %s26
      %p30 = pneg %p24
      %p31 = scmp.eq.s32.totalorder %s15, 1
      %p32 = por %p30, %p31
      %p33 = scmp.ne.s32.totalorder %s25, %s28
      %p34 = scmp.eq.s32.totalorder %s15, 0
      %p35 = por %p33, %p34
      %p36 = scmp.ne.s32.totalorder %s25, %s28
      %p37 = scmp.eq.s32.totalorder %s20, 1
      %p38 = por %p36, %p37
      %p39 = scmp.ne.s32.totalorder %s28, %s29
      %p40 = scmp.eq.s32.totalorder %s20, 0
      %p41 = por %p39, %p40
      %p42 = scmp.ne.s32.totalorder %s28, %s29
      %p43 = scmp.eq.s32.totalorder %s21, 1
      %p44 = por %p42, %p43
      %p46 = scmp.ne.s32.totalorder %s29, %s45
      %p47 = scmp.eq.s32.totalorder %s21, 0
      %p48 = por %p46, %p47
      %s50 = sadd.s32 %s49, 1
      %p53 = scmp.eq.s32.totalorder %s15, 1
      %p54 = scmp.ne.s32.totalorder %s49, %s51
      %p55 = scmp.eq.s32.totalorder %s15, 0
      %p56 = por %p54, %p55
      %p57 = scmp.ne.s32.totalorder %s49, %s51
      %p58 = scmp.eq.s32.totalorder %s20, 1
      %p59 = por %p57, %p58
      %p60 = scmp.ne.s32.totalorder %s51, %s52
      %p61 = scmp.eq.s32.totalorder %s20, 0
      %p62 = por %p60, %p61
      %p63 = scmp.ne.s32.totalorder %s51, %s52
      %p64 = scmp.eq.s32.totalorder %s21, 1
      %p65 = por %p63, %p64
      %p67 = scmp.ne.s32.totalorder %s52, %s66
      %p68 = scmp.eq.s32.totalorder %s21, 0
      %p69 = por %p67, %p68
      %s71 = sadd.s32 %s70, 1
      %p74 = scmp.eq.s32.totalorder %s15, 1
      %p75 = scmp.ne.s32.totalorder %s70, %s72
      %p76 = scmp.eq.s32.totalorder %s15, 0
      %p77 = por %p75, %p76
      %p78 = scmp.ne.s32.totalorder %s70, %s72
      %p79 = scmp.eq.s32.totalorder %s20, 1
      %p80 = por %p78, %p79
      %p81 = scmp.ne.s32.totalorder %s72, %s73
      %p82 = scmp.eq.s32.totalorder %s20, 0
      %p83 = por %p81, %p82
      %p84 = scmp.ne.s32.totalorder %s72, %s73
      %p85 = scmp.eq.s32.totalorder %s21, 1
      %p86 = por %p84, %p85
      %p88 = scmp.ne.s32.totalorder %s73, %s87
      %p89 = scmp.eq.s32.totalorder %s21, 0
      %p90 = por %p88, %p89
      %s92 = sadd.s32 %s91, 1
      %p95 = scmp.eq.s32.totalorder %s15, 1
      %p96 = scmp.ne.s32.totalorder %s91, %s93
      %p97 = scmp.eq.s32.totalorder %s15, 0
      %p98 = por %p96, %p97
      %p99 = scmp.ne.s32.totalorder %s91, %s93
      %p100 = scmp.eq.s32.totalorder %s20, 1
      %p101 = por %p99, %p100
      %p102 = scmp.ne.s32.totalorder %s93, %s94
      %p103 = scmp.eq.s32.totalorder %s20, 0
      %p104 = por %p102, %p103
      %p105 = scmp.ne.s32.totalorder %s93, %s94
      %p106 = scmp.eq.s32.totalorder %s21, 1
      %p107 = por %p105, %p106
      %p109 = scmp.ne.s32.totalorder %s94, %s108
      %p110 = scmp.eq.s32.totalorder %s21, 0
      %p111 = por %p109, %p110
      %s113 = sadd.s32 %s112, 1
      %p116 = scmp.eq.s32.totalorder %s15, 1
      %p117 = scmp.ne.s32.totalorder %s112, %s114
      %p118 = scmp.eq.s32.totalorder %s15, 0
      %p119 = por %p117, %p118
      %p120 = scmp.ne.s32.totalorder %s112, %s114
      %p121 = scmp.eq.s32.totalorder %s20, 1
      %p122 = por %p120, %p121
      %p123 = scmp.ne.s32.totalorder %s114, %s115
      %p124 = scmp.eq.s32.totalorder %s20, 0
      %p125 = por %p123, %p124
      %p126 = scmp.ne.s32.totalorder %s114, %s115
      %p127 = scmp.eq.s32.totalorder %s21, 1
      %p128 = por %p126, %p127
      %p130 = scmp.ne.s32.totalorder %s115, %s129
      %p131 = scmp.eq.s32.totalorder %s21, 0
      %p132 = por %p130, %p131
      %s134 = sadd.s32 %s133, 1
      %p137 = scmp.eq.s32.totalorder %s15, 1
      %p138 = scmp.ne.s32.totalorder %s133, %s135
      %p139 = scmp.eq.s32.totalorder %s15, 0
      %p140 = por %p138, %p139
      %p141 = scmp.ne.s32.totalorder %s133, %s135
      %p142 = scmp.eq.s32.totalorder %s20, 1
      %p143 = por %p141, %p142
      %p144 = scmp.ne.s32.totalorder %s135, %s136
      %p145 = scmp.eq.s32.totalorder %s20, 0
      %p146 = por %p144, %p145
      %p147 = scmp.ne.s32.totalorder %s135, %s136
      %p148 = scmp.eq.s32.totalorder %s21, 1
      %p149 = por %p147, %p148
      %p151 = scmp.ne.s32.totalorder %s136, %s150
      %p152 = scmp.eq.s32.totalorder %s21, 0
      %p153 = por %p151, %p152
      %s154 = ssub.s32 %s15, %s22
      %p155 = scmp.eq.s32.totalorder %s154, 0
      %s157 = sadd.s32 %s156, 1
      %s158 = scalar_select %p155, %s156, %s157
      %p161 = pneg %p155
      %p162 = scmp.eq.s32.totalorder %s15, 1
      %p163 = por %p161, %p162
      %p164 = scmp.ne.s32.totalorder %s156, %s159
      %p165 = scmp.eq.s32.totalorder %s15, 0
      %p166 = por %p164, %p165
      %p167 = scmp.ne.s32.totalorder %s156, %s159
      %p168 = scmp.eq.s32.totalorder %s20, 1
      %p169 = por %p167, %p168
      %p170 = scmp.ne.s32.totalorder %s159, %s160
      %p171 = scmp.eq.s32.totalorder %s20, 0
      %p172 = por %p170, %p171
      %p173 = scmp.ne.s32.totalorder %s159, %s160
      %p174 = scmp.eq.s32.totalorder %s21, 1
      %p175 = por %p173, %p174
      %p177 = scmp.ne.s32.totalorder %s160, %s176
      %p178 = scmp.eq.s32.totalorder %s21, 0
      %p179 = por %p177, %p178
      %p180 = scmp.le.s32.totalorder 1, %s15
      %p181 = scmp.lt.s32.totalorder %s15, 3
      %p182 = pnand %p180, %p181
      %p183 = pneg %p182
      // Predicated region
      $region9: #{tpu_custom_call.1} parent=5 // pred_check
        _
      $region10: #{tpu_custom_call.1} parent=5 // pred_check_branch
        %185 = sbr.rel (%p182) target = $region12
      $region11: #{tpu_custom_call.1} parent=5 // pred_region
        %s186 = ssub.s32 %s15, 1
        // Predicated region
        $region13: #{tpu_custom_call.1} parent=11 // pred_check
          %p187 = pneg %p62
        $region14: #{tpu_custom_call.1} parent=11 // pred_check_branch
          %189 = sbr.rel (%p187) target = $region16
        $region15: #{tpu_custom_call.1} parent=11 // pred_region
          _
        $region16: #{tpu_custom_call.1} parent=11 // pred_fallthru
          _
        // Predicated region
        $region17: #{tpu_custom_call.1} parent=11 // pred_check
          %p190 = pneg %p83
        $region18: #{tpu_custom_call.1} parent=11 // pred_check_branch
          %192 = sbr.rel (%p190) target = $region20
        $region19: #{tpu_custom_call.1} parent=11 // pred_region
          _
        $region20: #{tpu_custom_call.1} parent=11 // pred_fallthru
          _
        // Predicated region
        $region21: #{tpu_custom_call.1} parent=11 // pred_check
          %p193 = pneg %p104
        $region22: #{tpu_custom_call.1} parent=11 // pred_check_branch
          %195 = sbr.rel (%p193) target = $region24
        $region23: #{tpu_custom_call.1} parent=11 // pred_region
          _
        $region24: #{tpu_custom_call.1} parent=11 // pred_fallthru
          _
        // Predicated region
        $region25: #{tpu_custom_call.1} parent=11 // pred_check
          %p196 = pneg %p125
        $region26: #{tpu_custom_call.1} parent=11 // pred_check_branch
          %198 = sbr.rel (%p196) target = $region28
        $region27: #{tpu_custom_call.1} parent=11 // pred_region
          _
        $region28: #{tpu_custom_call.1} parent=11 // pred_fallthru
          _
        // Predicated region
        $region29: #{tpu_custom_call.1} parent=11 // pred_check
          %p199 = pneg %p146
        $region30: #{tpu_custom_call.1} parent=11 // pred_check_branch
          %201 = sbr.rel (%p199) target = $region32
        $region31: #{tpu_custom_call.1} parent=11 // pred_region
          _
        $region32: #{tpu_custom_call.1} parent=11 // pred_fallthru
          _
      $region12: #{tpu_custom_call.1} parent=5 // pred_fallthru
        _
      %p202 = scmp.lt.s32.totalorder %s15, 2
      // Predicated region
      $region33: #{tpu_custom_call.1} parent=5 // pred_check
        %p203 = pneg %p202
      $region34: #{tpu_custom_call.1} parent=5 // pred_check_branch
        %205 = sbr.rel (%p203) target = $region36
      $region35: #{tpu_custom_call.1} parent=5 // pred_region
        // Predicated region
        $region37: #{tpu_custom_call.1} parent=35 // pred_check
          %p206 = pneg %p35
        $region38: #{tpu_custom_call.1} parent=35 // pred_check_branch
          %208 = sbr.rel (%p206) target = $region40
        $region39: #{tpu_custom_call.1} parent=35 // pred_region
          %p209 = scmp.lt.s32.totalorder %s15, 1
          %s210 = scalar_select %p209, %s15, 1
          %s211 = smul.addr %s210, 8
          %s212 = scalar_lea.vmem %s0, %s211
        $region40: #{tpu_custom_call.1} parent=35 // pred_fallthru
          _
      $region36: #{tpu_custom_call.1} parent=5 // pred_fallthru
        _
      %p213 = scmp.le.s32.totalorder 1, %s15
      %p214 = scmp.lt.s32.totalorder %s15, 3
      %p215 = pnand %p213, %p214
      %p216 = pneg %p215
      // Predicated region
      $region41: #{tpu_custom_call.1} parent=5 // pred_check
        _
      $region42: #{tpu_custom_call.1} parent=5 // pred_check_branch
        %218 = sbr.rel (%p215) target = $region44
      $region43: #{tpu_custom_call.1} parent=5 // pred_region
        %s219 = ssub.s32 %s15, 1
        %p220 = scmp.lt.s32.totalorder %s20, 1
        %s221 = scalar_select %p220, %s20, 1
        %s222 = smul.addr %s221, 8
        %s223 = scalar_lea.vmem %s0, %s222
        %p224 = pneg %p41
        %p225 = pneg %p38
        %p226 = pneg %p62
        %p227 = pneg %p59
        %p228 = pneg %p83
        %p229 = pneg %p80
        %p230 = pneg %p104
        %p231 = pneg %p101
        %p232 = pneg %p125
        %p233 = pneg %p122
        %p234 = pneg %p146
        %p235 = pneg %p143
        %p236 = pneg %p172
        %p237 = pneg %p169
        %s238 = sand.u32 %s159, 1
        %s239 = scalar_lea.sflag [#allocation3], %s238
        %s240 = sand.u32 %s159, 1
        %s241 = smul.addr %s240, 8
        %s242 = scalar_lea.vmem [#allocation2], %s241
        %p243 = scmp.lt.s32.totalorder %s20, 1
        %s244 = scalar_select %p243, %s20, 1
        %s245 = smul.addr %s244, 8
        %s246 = scalar_lea.vmem %s0, %s245
        %v247 = vld [vmem:[%s246] sm:$0xff]
        %v248 = vld [vmem:[%s1] sm:$0xff]
        %v249 = vld [vmem:[%s1 + $0x8] sm:$0xff]
        %v250 = vld [vmem:[%s1 + $0x10] sm:$0xff]
        %v251 = vld [vmem:[%s1 + $0x18] sm:$0xff]
        %vm252 = vcmask 261120
        %v254 = vsel %vm252, %v247, 0
        %256 = vmatprep.subr.mxu0 0.0
        %257 = vmatpush1.msra.mxu0 %v248
        %258 = vmatprep.subr.mxu0 0.0
        %259 = vmatpush1.msra.mxu0 %v249
        %260 = vmatprep.subr.mxu0 0.0
        %261 = vmatpush1.msra.mxu0 %v250
        %262 = vmatprep.subr.mxu0 0.0
        %263 = vmatpush1.msra.mxu0 %v251
        %264 = vmatprep.subr.mxu0 0.0
        %265 = vmatpush1.msra.mxu0 0.0
        %266 = vmatprep.subr.mxu0 0.0
        %267 = vmatpush1.msra.mxu0 0.0
        %268 = vmatprep.subr.mxu0 0.0
        %269 = vmatpush1.msra.mxu0 0.0
        %270 = vmatprep.subr.mxu0 0.0
        %271 = vmatpush1.msra.mxu0 0.0
        %272 = vmatprep.subr.mxu0 0.0
        %273 = vmatpush1.msra.mxu0 0.0
        %274 = vmatprep.subr.mxu0 0.0
        %275 = vmatpush1.msra.mxu0 0.0
        %276 = vmatprep.subr.mxu0 0.0
        %277 = vmatpush1.msra.mxu0 0.0
        %278 = vmatprep.subr.mxu0 0.0
        %279 = vmatpush1.msra.mxu0 0.0
        %280 = vmatprep.subr.mxu0 0.0
        %281 = vmatpush1.msra.mxu0 0.0
        %282 = vmatprep.subr.mxu0 0.0
        %283 = vmatpush1.msra.mxu0 0.0
        %284 = vmatprep.subr.mxu0 0.0
        %285 = vmatpush1.msra.mxu0 0.0
        %286 = vmatprep.subr.mxu0 0.0
        %287 = vmatpush1.msra.mxu0 0.0
        %288 = vmatprep.subr.mxu0 0.0
        %289 = vmatpush1.msra.mxu0 0.0
        %290 = vmatprep.subr.mxu0 0.0
        %291 = vmatpush1.msra.mxu0 0.0
        %292 = vmatprep.subr.mxu0 0.0
        %293 = vmatpush1.msra.mxu0 0.0
        %294 = vmatprep.subr.mxu0 0.0
        %295 = vmatpush1.msra.mxu0 0.0
        %296 = vmatprep.subr.mxu0 0.0
        %297 = vmatpush1.msra.mxu0 0.0
        %298 = vmatprep.subr.mxu0 0.0
        %299 = vmatpush1.msra.mxu0 0.0
        %300 = vmatprep.subr.mxu0 0.0
        %301 = vmatpush1.msra.mxu0 0.0
        %302 = vmatprep.subr.mxu0 0.0
        %303 = vmatpush1.msra.mxu0 0.0
        %304 = vmatprep.subr.mxu0 0.0
        %305 = vmatpush1.msra.mxu0 0.0
        %306 = vmatprep.subr.mxu0 0.0
        %307 = vmatpush1.msra.mxu0 0.0
        %308 = vmatprep.subr.mxu0 0.0
        %309 = vmatpush1.msra.mxu0 0.0
        %310 = vmatprep.subr.mxu0 0.0
        %311 = vmatpush1.msra.mxu0 0.0
        %312 = vmatprep.subr.mxu0 0.0
        %313 = vmatpush1.msra.mxu0 0.0
        %314 = vmatprep.subr.mxu0 0.0
        %315 = vmatpush1.msra.mxu0 0.0
        %316 = vmatprep.subr.mxu0 0.0
        %317 = vmatpush1.msra.mxu0 0.0
        %318 = vmatprep.subr.mxu0 0.0
        %319 = vmatpush1.msra.mxu0 0.0
        %320 = vmatprep.mubr.f32.mxu0 0.0
        %321 = vmatmul.mubr.f32.gmra.mrb[0].mxu0 %v254
        %v322 = vpop.f32.mrb[0].mxu0
        %v323 = vadd.f32 0.0, %v322
        %v324 = vpop.f32.mrb[0].mxu0
        %325 = vdwg.mxu0
        %v326 = vld [vmem:[%s2] sm:$0xff]
        %v327 = vld [vmem:[%s2 + $0x8] sm:$0xff]
        %v328 = vld [vmem:[%s2 + $0x10] sm:$0xff]
        %v329 = vld [vmem:[%s2 + $0x18] sm:$0xff]
        %330 = vmatprep.subr.mxu0 0.0
        %331 = vmatpush1.msra.mxu0 %v326
        %332 = vmatprep.subr.mxu0 0.0
        %333 = vmatpush1.msra.mxu0 %v327
        %334 = vmatprep.subr.mxu0 0.0
        %335 = vmatpush1.msra.mxu0 %v328
        %336 = vmatprep.subr.mxu0 0.0
        %337 = vmatpush1.msra.mxu0 %v329
        %338 = vmatprep.subr.mxu0 0.0
        %339 = vmatpush1.msra.mxu0 0.0
        %340 = vmatprep.subr.mxu0 0.0
        %341 = vmatpush1.msra.mxu0 0.0
        %342 = vmatprep.subr.mxu0 0.0
        %343 = vmatpush1.msra.mxu0 0.0
        %344 = vmatprep.subr.mxu0 0.0
        %345 = vmatpush1.msra.mxu0 0.0
        %346 = vmatprep.subr.mxu0 0.0
        %347 = vmatpush1.msra.mxu0 0.0
        %348 = vmatprep.subr.mxu0 0.0
        %349 = vmatpush1.msra.mxu0 0.0
        %350 = vmatprep.subr.mxu0 0.0
        %351 = vmatpush1.msra.mxu0 0.0
        %352 = vmatprep.subr.mxu0 0.0
        %353 = vmatpush1.msra.mxu0 0.0
        %354 = vmatprep.subr.mxu0 0.0
        %355 = vmatpush1.msra.mxu0 0.0
        %356 = vmatprep.subr.mxu0 0.0
        %357 = vmatpush1.msra.mxu0 0.0
        %358 = vmatprep.subr.mxu0 0.0
        %359 = vmatpush1.msra.mxu0 0.0
        %360 = vmatprep.subr.mxu0 0.0
        %361 = vmatpush1.msra.mxu0 0.0
        %362 = vmatprep.subr.mxu0 0.0
        %363 = vmatpush1.msra.mxu0 0.0
        %364 = vmatprep.subr.mxu0 0.0
        %365 = vmatpush1.msra.mxu0 0.0
        %366 = vmatprep.subr.mxu0 0.0
        %367 = vmatpush1.msra.mxu0 0.0
        %368 = vmatprep.subr.mxu0 0.0
        %369 = vmatpush1.msra.mxu0 0.0
        %370 = vmatprep.subr.mxu0 0.0
        %371 = vmatpush1.msra.mxu0 0.0
        %372 = vmatprep.subr.mxu0 0.0
        %373 = vmatpush1.msra.mxu0 0.0
        %374 = vmatprep.subr.mxu0 0.0
        %375 = vmatpush1.msra.mxu0 0.0
        %376 = vmatprep.subr.mxu0 0.0
        %377 = vmatpush1.msra.mxu0 0.0
        %378 = vmatprep.subr.mxu0 0.0
        %379 = vmatpush1.msra.mxu0 0.0
        %380 = vmatprep.subr.mxu0 0.0
        %381 = vmatpush1.msra.mxu0 0.0
        %382 = vmatprep.subr.mxu0 0.0
        %383 = vmatpush1.msra.mxu0 0.0
        %384 = vmatprep.subr.mxu0 0.0
        %385 = vmatpush1.msra.mxu0 0.0
        %386 = vmatprep.subr.mxu0 0.0
        %387 = vmatpush1.msra.mxu0 0.0
        %388 = vmatprep.subr.mxu0 0.0
        %389 = vmatpush1.msra.mxu0 0.0
        %390 = vmatprep.subr.mxu0 0.0
        %391 = vmatpush1.msra.mxu0 0.0
        %392 = vmatprep.subr.mxu0 0.0
        %393 = vmatpush1.msra.mxu0 0.0
        %394 = vmatprep.mubr.f32.mxu0 0.0
        %395 = vmatmul.mubr.f32.gmra.mrb[0].mxu0 %v254
        %v396 = vpop.f32.mrb[0].mxu0
        %v397 = vadd.f32 0.0, %v396
        %v398 = vpop.f32.mrb[0].mxu0
        %399 = vdwg.mxu0
        %v400 = vld [vmem:[%s3] sm:$0xff]
        %v401 = vld [vmem:[%s3 + $0x8] sm:$0xff]
        %v402 = vld [vmem:[%s3 + $0x10] sm:$0xff]
        %v403 = vld [vmem:[%s3 + $0x18] sm:$0xff]
        %404 = vmatprep.subr.mxu0 0.0
        %405 = vmatpush1.msra.mxu0 %v400
        %406 = vmatprep.subr.mxu0 0.0
        %407 = vmatpush1.msra.mxu0 %v401
        %408 = vmatprep.subr.mxu0 0.0
        %409 = vmatpush1.msra.mxu0 %v402
        %410 = vmatprep.subr.mxu0 0.0
        %411 = vmatpush1.msra.mxu0 %v403
        %412 = vmatprep.subr.mxu0 0.0
        %413 = vmatpush1.msra.mxu0 0.0
        %414 = vmatprep.subr.mxu0 0.0
        %415 = vmatpush1.msra.mxu0 0.0
        %416 = vmatprep.subr.mxu0 0.0
        %417 = vmatpush1.msra.mxu0 0.0
        %418 = vmatprep.subr.mxu0 0.0
        %419 = vmatpush1.msra.mxu0 0.0
        %420 = vmatprep.subr.mxu0 0.0
        %421 = vmatpush1.msra.mxu0 0.0
        %422 = vmatprep.subr.mxu0 0.0
        %423 = vmatpush1.msra.mxu0 0.0
        %424 = vmatprep.subr.mxu0 0.0
        %425 = vmatpush1.msra.mxu0 0.0
        %426 = vmatprep.subr.mxu0 0.0
        %427 = vmatpush1.msra.mxu0 0.0
        %428 = vmatprep.subr.mxu0 0.0
        %429 = vmatpush1.msra.mxu0 0.0
        %430 = vmatprep.subr.mxu0 0.0
        %431 = vmatpush1.msra.mxu0 0.0
        %432 = vmatprep.subr.mxu0 0.0
        %433 = vmatpush1.msra.mxu0 0.0
        %434 = vmatprep.subr.mxu0 0.0
        %435 = vmatpush1.msra.mxu0 0.0
        %436 = vmatprep.subr.mxu0 0.0
        %437 = vmatpush1.msra.mxu0 0.0
        %438 = vmatprep.subr.mxu0 0.0
        %439 = vmatpush1.msra.mxu0 0.0
        %440 = vmatprep.subr.mxu0 0.0
        %441 = vmatpush1.msra.mxu0 0.0
        %442 = vmatprep.subr.mxu0 0.0
        %443 = vmatpush1.msra.mxu0 0.0
        %444 = vmatprep.subr.mxu0 0.0
        %445 = vmatpush1.msra.mxu0 0.0
        %446 = vmatprep.subr.mxu0 0.0
        %447 = vmatpush1.msra.mxu0 0.0
        %448 = vmatprep.subr.mxu0 0.0
        %449 = vmatpush1.msra.mxu0 0.0
        %450 = vmatprep.subr.mxu0 0.0
        %451 = vmatpush1.msra.mxu0 0.0
        %452 = vmatprep.subr.mxu0 0.0
        %453 = vmatpush1.msra.mxu0 0.0
        %454 = vmatprep.subr.mxu0 0.0
        %455 = vmatpush1.msra.mxu0 0.0
        %456 = vmatprep.subr.mxu0 0.0
        %457 = vmatpush1.msra.mxu0 0.0
        %458 = vmatprep.subr.mxu0 0.0
        %459 = vmatpush1.msra.mxu0 0.0
        %460 = vmatprep.subr.mxu0 0.0
        %461 = vmatpush1.msra.mxu0 0.0
        %462 = vmatprep.subr.mxu0 0.0
        %463 = vmatpush1.msra.mxu0 0.0
        %464 = vmatprep.subr.mxu0 0.0
        %465 = vmatpush1.msra.mxu0 0.0
        %466 = vmatprep.subr.mxu0 0.0
        %467 = vmatpush1.msra.mxu0 0.0
        %468 = vmatprep.mubr.f32.mxu0 0.0
        %469 = vmatmul.mubr.f32.gmra.mrb[0].mxu0 %v254
        %v470 = vpop.f32.mrb[0].mxu0
        %v471 = vadd.f32 0.0, %v470
        %v472 = vpop.f32.mrb[0].mxu0
        %473 = vdwg.mxu0
        %vm474 = vcmask 64512
        %v476 = vsel %vm474, %v323, 0
        %v479 = vsel %vm474, %v397, 0
        %481 = vmatprep.subr.mxu0 0.0
        %482 = vmatpush1.xpose.msra.mxu0 %v479
        %483 = vmatprep.subr.mxu0 0.0
        %484 = vmatpush1.xpose.msra.mxu0 0.0
        %485 = vmatprep.subr.mxu0 0.0
        %486 = vmatpush1.xpose.msra.mxu0 0.0
        %487 = vmatprep.subr.mxu0 0.0
        %488 = vmatpush1.xpose.msra.mxu0 0.0
        %489 = vmatprep.subr.mxu0 0.0
        %490 = vmatpush1.xpose.msra.mxu0 0.0
        %491 = vmatprep.subr.mxu0 0.0
        %492 = vmatpush1.xpose.msra.mxu0 0.0
        %493 = vmatprep.subr.mxu0 0.0
        %494 = vmatpush1.xpose.msra.mxu0 0.0
        %495 = vmatprep.subr.mxu0 0.0
        %496 = vmatpush1.xpose.msra.mxu0 0.0
        %497 = vmatprep.subr.mxu0 0.0
        %498 = vmatpush1.xpose.msra.mxu0 0.0
        %499 = vmatprep.subr.mxu0 0.0
        %500 = vmatpush1.xpose.msra.mxu0 0.0
        %501 = vmatprep.subr.mxu0 0.0
        %502 = vmatpush1.xpose.msra.mxu0 0.0
        %503 = vmatprep.subr.mxu0 0.0
        %504 = vmatpush1.xpose.msra.mxu0 0.0
        %505 = vmatprep.subr.mxu0 0.0
        %506 = vmatpush1.xpose.msra.mxu0 0.0
        %507 = vmatprep.subr.mxu0 0.0
        %508 = vmatpush1.xpose.msra.mxu0 0.0
        %509 = vmatprep.subr.mxu0 0.0
        %510 = vmatpush1.xpose.msra.mxu0 0.0
        %511 = vmatprep.subr.mxu0 0.0
        %512 = vmatpush1.xpose.msra.mxu0 0.0
        %513 = vmatprep.subr.mxu0 0.0
        %514 = vmatpush1.xpose.msra.mxu0 0.0
        %515 = vmatprep.subr.mxu0 0.0
        %516 = vmatpush1.xpose.msra.mxu0 0.0
        %517 = vmatprep.subr.mxu0 0.0
        %518 = vmatpush1.xpose.msra.mxu0 0.0
        %519 = vmatprep.subr.mxu0 0.0
        %520 = vmatpush1.xpose.msra.mxu0 0.0
        %521 = vmatprep.subr.mxu0 0.0
        %522 = vmatpush1.xpose.msra.mxu0 0.0
        %523 = vmatprep.subr.mxu0 0.0
        %524 = vmatpush1.xpose.msra.mxu0 0.0
        %525 = vmatprep.subr.mxu0 0.0
        %526 = vmatpush1.xpose.msra.mxu0 0.0
        %527 = vmatprep.subr.mxu0 0.0
        %528 = vmatpush1.xpose.msra.mxu0 0.0
        %529 = vmatprep.subr.mxu0 0.0
        %530 = vmatpush1.xpose.msra.mxu0 0.0
        %531 = vmatprep.subr.mxu0 0.0
        %532 = vmatpush1.xpose.msra.mxu0 0.0
        %533 = vmatprep.subr.mxu0 0.0
        %534 = vmatpush1.xpose.msra.mxu0 0.0
        %535 = vmatprep.subr.mxu0 0.0
        %536 = vmatpush1.xpose.msra.mxu0 0.0
        %537 = vmatprep.subr.mxu0 0.0
        %538 = vmatpush1.xpose.msra.mxu0 0.0
        %539 = vmatprep.subr.mxu0 0.0
        %540 = vmatpush1.xpose.msra.mxu0 0.0
        %541 = vmatprep.subr.mxu0 0.0
        %542 = vmatpush1.xpose.msra.mxu0 0.0
        %543 = vmatprep.subr.mxu0 0.0
        %544 = vmatpush1.xpose.msra.mxu0 0.0
        %545 = vmatprep.mubr.f32.mxu0 0.0
        %546 = vmatmul.mubr.f32.gmra.mrb[0].mxu0 %v476
        %v547 = vpop.f32.mrb[0].mxu0
        %v548 = vadd.f32 0.0, %v547
        %v549 = vpop.f32.mrb[0].mxu0
        %550 = vdwg.mxu0
        %v551 = vmax.f32 %v548, 0.0
        %v552 = vsel %vm474, %v551, -inf
        %553 = vmax.xlane.f32.xlu0 %v552
        %v554 = vpop.xlane.xlu0 %553
        %v555 = vsub.f32 %v551, %v554
        %v556 = vmul.f32 %v555, 1.442695
        %v557 = vpow.pop %v556
        %v558 = vsel %vm474, %v557, 0.0
        %559 = vadd.xlane.f32.xlu0 %v558
        %v560 = vpop.xlane.xlu0 %559
        %v561 = vrcp.pop %v560
        %v562 = vmul.f32 %v557, %v561
        %v564 = vsel %vm474, %v562, 0
        %566 = vmatprep.subr.mxu0 0.0
        %567 = vmatpush1.msra.mxu0 %v471
        %568 = vmatprep.subr.mxu0 0.0
        %569 = vmatpush1.msra.mxu0 0.0
        %570 = vmatprep.subr.mxu0 0.0
        %571 = vmatpush1.msra.mxu0 0.0
        %572 = vmatprep.subr.mxu0 0.0
        %573 = vmatpush1.msra.mxu0 0.0
        %574 = vmatprep.subr.mxu0 0.0
        %575 = vmatpush1.msra.mxu0 0.0
        %576 = vmatprep.subr.mxu0 0.0
        %577 = vmatpush1.msra.mxu0 0.0
        %578 = vmatprep.subr.mxu0 0.0
        %579 = vmatpush1.msra.mxu0 0.0
        %580 = vmatprep.subr.mxu0 0.0
        %581 = vmatpush1.msra.mxu0 0.0
        %582 = vmatprep.subr.mxu0 0.0
        %583 = vmatpush1.msra.mxu0 0.0
        %584 = vmatprep.subr.mxu0 0.0
        %585 = vmatpush1.msra.mxu0 0.0
        %586 = vmatprep.subr.mxu0 0.0
        %587 = vmatpush1.msra.mxu0 0.0
        %588 = vmatprep.subr.mxu0 0.0
        %589 = vmatpush1.msra.mxu0 0.0
        %590 = vmatprep.subr.mxu0 0.0
        %591 = vmatpush1.msra.mxu0 0.0
        %592 = vmatprep.subr.mxu0 0.0
        %593 = vmatpush1.msra.mxu0 0.0
        %594 = vmatprep.subr.mxu0 0.0
        %595 = vmatpush1.msra.mxu0 0.0
        %596 = vmatprep.subr.mxu0 0.0
        %597 = vmatpush1.msra.mxu0 0.0
        %598 = vmatprep.subr.mxu0 0.0
        %599 = vmatpush1.msra.mxu0 0.0
        %600 = vmatprep.subr.mxu0 0.0
        %601 = vmatpush1.msra.mxu0 0.0
        %602 = vmatprep.subr.mxu0 0.0
        %603 = vmatpush1.msra.mxu0 0.0
        %604 = vmatprep.subr.mxu0 0.0
        %605 = vmatpush1.msra.mxu0 0.0
        %606 = vmatprep.subr.mxu0 0.0
        %607 = vmatpush1.msra.mxu0 0.0
        %608 = vmatprep.subr.mxu0 0.0
        %609 = vmatpush1.msra.mxu0 0.0
        %610 = vmatprep.subr.mxu0 0.0
        %611 = vmatpush1.msra.mxu0 0.0
        %612 = vmatprep.subr.mxu0 0.0
        %613 = vmatpush1.msra.mxu0 0.0
        %614 = vmatprep.subr.mxu0 0.0
        %615 = vmatpush1.msra.mxu0 0.0
        %616 = vmatprep.subr.mxu0 0.0
        %617 = vmatpush1.msra.mxu0 0.0
        %618 = vmatprep.subr.mxu0 0.0
        %619 = vmatpush1.msra.mxu0 0.0
        %620 = vmatprep.subr.mxu0 0.0
        %621 = vmatpush1.msra.mxu0 0.0
        %622 = vmatprep.subr.mxu0 0.0
        %623 = vmatpush1.msra.mxu0 0.0
        %624 = vmatprep.subr.mxu0 0.0
        %625 = vmatpush1.msra.mxu0 0.0
        %626 = vmatprep.subr.mxu0 0.0
        %627 = vmatpush1.msra.mxu0 0.0
        %628 = vmatprep.subr.mxu0 0.0
        %629 = vmatpush1.msra.mxu0 0.0
        %630 = vmatprep.mubr.f32.mxu0 0.0
        %631 = vmatmul.mubr.f32.gmra.mrb[0].mxu0 %v564
        %v632 = vpop.f32.mrb[0].mxu0
        %v633 = vadd.f32 0.0, %v632
        %v634 = vpop.f32.mrb[0].mxu0
        %635 = vdwg.mxu0
        %v636 = vld [vmem:[%s4] sm:$0xff]
        %s637 = scalar_lea.vmem %s1, 32
        %v638 = vld [vmem:[%s637] sm:$0xff]
        %v639 = vld [vmem:[%s637 + $0x8] sm:$0xff]
        %v640 = vld [vmem:[%s637 + $0x10] sm:$0xff]
        %v641 = vld [vmem:[%s637 + $0x18] sm:$0xff]
        %642 = vmatprep.subr.mxu0 0.0
        %643 = vmatpush1.msra.mxu0 %v638
        %644 = vmatprep.subr.mxu0 0.0
        %645 = vmatpush1.msra.mxu0 %v639
        %646 = vmatprep.subr.mxu0 0.0
        %647 = vmatpush1.msra.mxu0 %v640
        %648 = vmatprep.subr.mxu0 0.0
        %649 = vmatpush1.msra.mxu0 %v641
        %650 = vmatprep.subr.mxu0 0.0
        %651 = vmatpush1.msra.mxu0 0.0
        %652 = vmatprep.subr.mxu0 0.0
        %653 = vmatpush1.msra.mxu0 0.0
        %654 = vmatprep.subr.mxu0 0.0
        %655 = vmatpush1.msra.mxu0 0.0
        %656 = vmatprep.subr.mxu0 0.0
        %657 = vmatpush1.msra.mxu0 0.0
        %658 = vmatprep.subr.mxu0 0.0
        %659 = vmatpush1.msra.mxu0 0.0
        %660 = vmatprep.subr.mxu0 0.0
        %661 = vmatpush1.msra.mxu0 0.0
        %662 = vmatprep.subr.mxu0 0.0
        %663 = vmatpush1.msra.mxu0 0.0
        %664 = vmatprep.subr.mxu0 0.0
        %665 = vmatpush1.msra.mxu0 0.0
        %666 = vmatprep.subr.mxu0 0.0
        %667 = vmatpush1.msra.mxu0 0.0
        %668 = vmatprep.subr.mxu0 0.0
        %669 = vmatpush1.msra.mxu0 0.0
        %670 = vmatprep.subr.mxu0 0.0
        %671 = vmatpush1.msra.mxu0 0.0
        %672 = vmatprep.subr.mxu0 0.0
        %673 = vmatpush1.msra.mxu0 0.0
        %674 = vmatprep.subr.mxu0 0.0
        %675 = vmatpush1.msra.mxu0 0.0
        %676 = vmatprep.subr.mxu0 0.0
        %677 = vmatpush1.msra.mxu0 0.0
        %678 = vmatprep.subr.mxu0 0.0
        %679 = vmatpush1.msra.mxu0 0.0
        %680 = vmatprep.subr.mxu0 0.0
        %681 = vmatpush1.msra.mxu0 0.0
        %682 = vmatprep.subr.mxu0 0.0
        %683 = vmatpush1.msra.mxu0 0.0
        %684 = vmatprep.subr.mxu0 0.0
        %685 = vmatpush1.msra.mxu0 0.0
        %686 = vmatprep.subr.mxu0 0.0
        %687 = vmatpush1.msra.mxu0 0.0
        %688 = vmatprep.subr.mxu0 0.0
        %689 = vmatpush1.msra.mxu0 0.0
        %690 = vmatprep.subr.mxu0 0.0
        %691 = vmatpush1.msra.mxu0 0.0
        %692 = vmatprep.subr.mxu0 0.0
        %693 = vmatpush1.msra.mxu0 0.0
        %694 = vmatprep.subr.mxu0 0.0
        %695 = vmatpush1.msra.mxu0 0.0
        %696 = vmatprep.subr.mxu0 0.0
        %697 = vmatpush1.msra.mxu0 0.0
        %698 = vmatprep.subr.mxu0 0.0
        %699 = vmatpush1.msra.mxu0 0.0
        %700 = vmatprep.subr.mxu0 0.0
        %701 = vmatpush1.msra.mxu0 0.0
        %702 = vmatprep.subr.mxu0 0.0
        %703 = vmatpush1.msra.mxu0 0.0
        %704 = vmatprep.subr.mxu0 0.0
        %705 = vmatpush1.msra.mxu0 0.0
        %706 = vmatprep.mubr.f32.mxu0 0.0
        %707 = vmatmul.mubr.f32.gmra.mrb[0].mxu0 %v254
        %v708 = vpop.f32.mrb[0].mxu0
        %v709 = vadd.f32 0.0, %v708
        %v710 = vpop.f32.mrb[0].mxu0
        %711 = vdwg.mxu0
        %s712 = scalar_lea.vmem %s2, 32
        %v713 = vld [vmem:[%s712] sm:$0xff]
        %v714 = vld [vmem:[%s712 + $0x8] sm:$0xff]
        %v715 = vld [vmem:[%s712 + $0x10] sm:$0xff]
        %v716 = vld [vmem:[%s712 + $0x18] sm:$0xff]
        %717 = vmatprep.subr.mxu0 0.0
        %718 = vmatpush1.msra.mxu0 %v713
        %719 = vmatprep.subr.mxu0 0.0
        %720 = vmatpush1.msra.mxu0 %v714
        %721 = vmatprep.subr.mxu0 0.0
        %722 = vmatpush1.msra.mxu0 %v715
        %723 = vmatprep.subr.mxu0 0.0
        %724 = vmatpush1.msra.mxu0 %v716
        %725 = vmatprep.subr.mxu0 0.0
        %726 = vmatpush1.msra.mxu0 0.0
        %727 = vmatprep.subr.mxu0 0.0
        %728 = vmatpush1.msra.mxu0 0.0
        %729 = vmatprep.subr.mxu0 0.0
        %730 = vmatpush1.msra.mxu0 0.0
        %731 = vmatprep.subr.mxu0 0.0
        %732 = vmatpush1.msra.mxu0 0.0
        %733 = vmatprep.subr.mxu0 0.0
        %734 = vmatpush1.msra.mxu0 0.0
        %735 = vmatprep.subr.mxu0 0.0
        %736 = vmatpush1.msra.mxu0 0.0
        %737 = vmatprep.subr.mxu0 0.0
        %738 = vmatpush1.msra.mxu0 0.0
        %739 = vmatprep.subr.mxu0 0.0
        %740 = vmatpush1.msra.mxu0 0.0
        %741 = vmatprep.subr.mxu0 0.0
        %742 = vmatpush1.msra.mxu0 0.0
        %743 = vmatprep.subr.mxu0 0.0
        %744 = vmatpush1.msra.mxu0 0.0
        %745 = vmatprep.subr.mxu0 0.0
        %746 = vmatpush1.msra.mxu0 0.0
        %747 = vmatprep.subr.mxu0 0.0
        %748 = vmatpush1.msra.mxu0 0.0
        %749 = vmatprep.subr.mxu0 0.0
        %750 = vmatpush1.msra.mxu0 0.0
        %751 = vmatprep.subr.mxu0 0.0
        %752 = vmatpush1.msra.mxu0 0.0
        %753 = vmatprep.subr.mxu0 0.0
        %754 = vmatpush1.msra.mxu0 0.0
        %755 = vmatprep.subr.mxu0 0.0
        %756 = vmatpush1.msra.mxu0 0.0
        %757 = vmatprep.subr.mxu0 0.0
        %758 = vmatpush1.msra.mxu0 0.0
        %759 = vmatprep.subr.mxu0 0.0
        %760 = vmatpush1.msra.mxu0 0.0
        %761 = vmatprep.subr.mxu0 0.0
        %762 = vmatpush1.msra.mxu0 0.0
        %763 = vmatprep.subr.mxu0 0.0
        %764 = vmatpush1.msra.mxu0 0.0
        %765 = vmatprep.subr.mxu0 0.0
        %766 = vmatpush1.msra.mxu0 0.0
        %767 = vmatprep.subr.mxu0 0.0
        %768 = vmatpush1.msra.mxu0 0.0
        %769 = vmatprep.subr.mxu0 0.0
        %770 = vmatpush1.msra.mxu0 0.0
        %771 = vmatprep.subr.mxu0 0.0
        %772 = vmatpush1.msra.mxu0 0.0
        %773 = vmatprep.subr.mxu0 0.0
        %774 = vmatpush1.msra.mxu0 0.0
        %775 = vmatprep.subr.mxu0 0.0
        %776 = vmatpush1.msra.mxu0 0.0
        %777 = vmatprep.subr.mxu0 0.0
        %778 = vmatpush1.msra.mxu0 0.0
        %779 = vmatprep.subr.mxu0 0.0
        %780 = vmatpush1.msra.mxu0 0.0
        %781 = vmatprep.mubr.f32.mxu0 0.0
        %782 = vmatmul.mubr.f32.gmra.mrb[0].mxu0 %v254
        %v783 = vpop.f32.mrb[0].mxu0
        %v784 = vadd.f32 0.0, %v783
        %v785 = vpop.f32.mrb[0].mxu0
        %786 = vdwg.mxu0
        %s787 = scalar_lea.vmem %s3, 32
        %v788 = vld [vmem:[%s787] sm:$0xff]
        %v789 = vld [vmem:[%s787 + $0x8] sm:$0xff]
        %v790 = vld [vmem:[%s787 + $0x10] sm:$0xff]
        %v791 = vld [vmem:[%s787 + $0x18] sm:$0xff]
        %792 = vmatprep.subr.mxu0 0.0
        %793 = vmatpush1.msra.mxu0 %v788
        %794 = vmatprep.subr.mxu0 0.0
        %795 = vmatpush1.msra.mxu0 %v789
        %796 = vmatprep.subr.mxu0 0.0
        %797 = vmatpush1.msra.mxu0 %v790
        %798 = vmatprep.subr.mxu0 0.0
        %799 = vmatpush1.msra.mxu0 %v791
        %800 = vmatprep.subr.mxu0 0.0
        %801 = vmatpush1.msra.mxu0 0.0
        %802 = vmatprep.subr.mxu0 0.0
        %803 = vmatpush1.msra.mxu0 0.0
        %804 = vmatprep.subr.mxu0 0.0
        %805 = vmatpush1.msra.mxu0 0.0
        %806 = vmatprep.subr.mxu0 0.0
        %807 = vmatpush1.msra.mxu0 0.0
        %808 = vmatprep.subr.mxu0 0.0
        %809 = vmatpush1.msra.mxu0 0.0
        %810 = vmatprep.subr.mxu0 0.0
        %811 = vmatpush1.msra.mxu0 0.0
        %812 = vmatprep.subr.mxu0 0.0
        %813 = vmatpush1.msra.mxu0 0.0
        %814 = vmatprep.subr.mxu0 0.0
        %815 = vmatpush1.msra.mxu0 0.0
        %816 = vmatprep.subr.mxu0 0.0
        %817 = vmatpush1.msra.mxu0 0.0
        %818 = vmatprep.subr.mxu0 0.0
        %819 = vmatpush1.msra.mxu0 0.0
        %820 = vmatprep.subr.mxu0 0.0
        %821 = vmatpush1.msra.mxu0 0.0
        %822 = vmatprep.subr.mxu0 0.0
        %823 = vmatpush1.msra.mxu0 0.0
        %824 = vmatprep.subr.mxu0 0.0
        %825 = vmatpush1.msra.mxu0 0.0
        %826 = vmatprep.subr.mxu0 0.0
        %827 = vmatpush1.msra.mxu0 0.0
        %828 = vmatprep.subr.mxu0 0.0
        %829 = vmatpush1.msra.mxu0 0.0
        %830 = vmatprep.subr.mxu0 0.0
        %831 = vmatpush1.msra.mxu0 0.0
        %832 = vmatprep.subr.mxu0 0.0
        %833 = vmatpush1.msra.mxu0 0.0
        %834 = vmatprep.subr.mxu0 0.0
        %835 = vmatpush1.msra.mxu0 0.0
        %836 = vmatprep.subr.mxu0 0.0
        %837 = vmatpush1.msra.mxu0 0.0
        %838 = vmatprep.subr.mxu0 0.0
        %839 = vmatpush1.msra.mxu0 0.0
        %840 = vmatprep.subr.mxu0 0.0
        %841 = vmatpush1.msra.mxu0 0.0
        %842 = vmatprep.subr.mxu0 0.0
        %843 = vmatpush1.msra.mxu0 0.0
        %844 = vmatprep.subr.mxu0 0.0
        %845 = vmatpush1.msra.mxu0 0.0
        %846 = vmatprep.subr.mxu0 0.0
        %847 = vmatpush1.msra.mxu0 0.0
        %848 = vmatprep.subr.mxu0 0.0
        %849 = vmatpush1.msra.mxu0 0.0
        %850 = vmatprep.subr.mxu0 0.0
        %851 = vmatpush1.msra.mxu0 0.0
        %852 = vmatprep.subr.mxu0 0.0
        %853 = vmatpush1.msra.mxu0 0.0
        %854 = vmatprep.subr.mxu0 0.0
        %855 = vmatpush1.msra.mxu0 0.0
        %856 = vmatprep.mubr.f32.mxu0 0.0
        %857 = vmatmul.mubr.f32.gmra.mrb[0].mxu0 %v254
        %v858 = vpop.f32.mrb[0].mxu0
        %v859 = vadd.f32 0.0, %v858
        %v860 = vpop.f32.mrb[0].mxu0
        %861 = vdwg.mxu0
        %v863 = vsel %vm474, %v709, 0
        %v866 = vsel %vm474, %v784, 0
        %868 = vmatprep.subr.mxu0 0.0
        %869 = vmatpush1.xpose.msra.mxu0 %v866
        %870 = vmatprep.subr.mxu0 0.0
        %871 = vmatpush1.xpose.msra.mxu0 0.0
        %872 = vmatprep.subr.mxu0 0.0
        %873 = vmatpush1.xpose.msra.mxu0 0.0
        %874 = vmatprep.subr.mxu0 0.0
        %875 = vmatpush1.xpose.msra.mxu0 0.0
        %876 = vmatprep.subr.mxu0 0.0
        %877 = vmatpush1.xpose.msra.mxu0 0.0
        %878 = vmatprep.subr.mxu0 0.0
        %879 = vmatpush1.xpose.msra.mxu0 0.0
        %880 = vmatprep.subr.mxu0 0.0
        %881 = vmatpush1.xpose.msra.mxu0 0.0
        %882 = vmatprep.subr.mxu0 0.0
        %883 = vmatpush1.xpose.msra.mxu0 0.0
        %884 = vmatprep.subr.mxu0 0.0
        %885 = vmatpush1.xpose.msra.mxu0 0.0
        %886 = vmatprep.subr.mxu0 0.0
        %887 = vmatpush1.xpose.msra.mxu0 0.0
        %888 = vmatprep.subr.mxu0 0.0
        %889 = vmatpush1.xpose.msra.mxu0 0.0
        %890 = vmatprep.subr.mxu0 0.0
        %891 = vmatpush1.xpose.msra.mxu0 0.0
        %892 = vmatprep.subr.mxu0 0.0
        %893 = vmatpush1.xpose.msra.mxu0 0.0
        %894 = vmatprep.subr.mxu0 0.0
        %895 = vmatpush1.xpose.msra.mxu0 0.0
        %896 = vmatprep.subr.mxu0 0.0
        %897 = vmatpush1.xpose.msra.mxu0 0.0
        %898 = vmatprep.subr.mxu0 0.0
        %899 = vmatpush1.xpose.msra.mxu0 0.0
        %900 = vmatprep.subr.mxu0 0.0
        %901 = vmatpush1.xpose.msra.mxu0 0.0
        %902 = vmatprep.subr.mxu0 0.0
        %903 = vmatpush1.xpose.msra.mxu0 0.0
        %904 = vmatprep.subr.mxu0 0.0
        %905 = vmatpush1.xpose.msra.mxu0 0.0
        %906 = vmatprep.subr.mxu0 0.0
        %907 = vmatpush1.xpose.msra.mxu0 0.0
        %908 = vmatprep.subr.mxu0 0.0
        %909 = vmatpush1.xpose.msra.mxu0 0.0
        %910 = vmatprep.subr.mxu0 0.0
        %911 = vmatpush1.xpose.msra.mxu0 0.0
        %912 = vmatprep.subr.mxu0 0.0
        %913 = vmatpush1.xpose.msra.mxu0 0.0
        %914 = vmatprep.subr.mxu0 0.0
        %915 = vmatpush1.xpose.msra.mxu0 0.0
        %916 = vmatprep.subr.mxu0 0.0
        %917 = vmatpush1.xpose.msra.mxu0 0.0
        %918 = vmatprep.subr.mxu0 0.0
        %919 = vmatpush1.xpose.msra.mxu0 0.0
        %920 = vmatprep.subr.mxu0 0.0
        %921 = vmatpush1.xpose.msra.mxu0 0.0
        %922 = vmatprep.subr.mxu0 0.0
        %923 = vmatpush1.xpose.msra.mxu0 0.0
        %924 = vmatprep.subr.mxu0 0.0
        %925 = vmatpush1.xpose.msra.mxu0 0.0
        %926 = vmatprep.subr.mxu0 0.0
        %927 = vmatpush1.xpose.msra.mxu0 0.0
        %928 = vmatprep.subr.mxu0 0.0
        %929 = vmatpush1.xpose.msra.mxu0 0.0
        %930 = vmatprep.subr.mxu0 0.0
        %931 = vmatpush1.xpose.msra.mxu0 0.0
        %932 = vmatprep.mubr.f32.mxu0 0.0
        %933 = vmatmul.mubr.f32.gmra.mrb[0].mxu0 %v863
        %v934 = vpop.f32.mrb[0].mxu0
        %v935 = vadd.f32 0.0, %v934
        %v936 = vpop.f32.mrb[0].mxu0
        %937 = vdwg.mxu0
        %v938 = vmax.f32 %v935, 0.0
        %v939 = vsel %vm474, %v938, -inf
        %940 = vmax.xlane.f32.xlu0 %v939
        %v941 = vpop.xlane.xlu0 %940
        %v942 = vsub.f32 %v938, %v941
        %v943 = vmul.f32 %v942, 1.442695
        %v944 = vpow.pop %v943
        %v945 = vsel %vm474, %v944, 0.0
        %946 = vadd.xlane.f32.xlu0 %v945
        %v947 = vpop.xlane.xlu0 %946
        %v948 = vrcp.pop %v947
        %v949 = vmul.f32 %v944, %v948
        %v951 = vsel %vm474, %v949, 0
        %953 = vmatprep.subr.mxu0 0.0
        %954 = vmatpush1.msra.mxu0 %v859
        %955 = vmatprep.subr.mxu0 0.0
        %956 = vmatpush1.msra.mxu0 0.0
        %957 = vmatprep.subr.mxu0 0.0
        %958 = vmatpush1.msra.mxu0 0.0
        %959 = vmatprep.subr.mxu0 0.0
        %960 = vmatpush1.msra.mxu0 0.0
        %961 = vmatprep.subr.mxu0 0.0
        %962 = vmatpush1.msra.mxu0 0.0
        %963 = vmatprep.subr.mxu0 0.0
        %964 = vmatpush1.msra.mxu0 0.0
        %965 = vmatprep.subr.mxu0 0.0
        %966 = vmatpush1.msra.mxu0 0.0
        %967 = vmatprep.subr.mxu0 0.0
        %968 = vmatpush1.msra.mxu0 0.0
        %969 = vmatprep.subr.mxu0 0.0
        %970 = vmatpush1.msra.mxu0 0.0
        %971 = vmatprep.subr.mxu0 0.0
        %972 = vmatpush1.msra.mxu0 0.0
        %973 = vmatprep.subr.mxu0 0.0
        %974 = vmatpush1.msra.mxu0 0.0
        %975 = vmatprep.subr.mxu0 0.0
        %976 = vmatpush1.msra.mxu0 0.0
        %977 = vmatprep.subr.mxu0 0.0
        %978 = vmatpush1.msra.mxu0 0.0
        %979 = vmatprep.subr.mxu0 0.0
        %980 = vmatpush1.msra.mxu0 0.0
        %981 = vmatprep.subr.mxu0 0.0
        %982 = vmatpush1.msra.mxu0 0.0
        %983 = vmatprep.subr.mxu0 0.0
        %984 = vmatpush1.msra.mxu0 0.0
        %985 = vmatprep.subr.mxu0 0.0
        %986 = vmatpush1.msra.mxu0 0.0
        %987 = vmatprep.subr.mxu0 0.0
        %988 = vmatpush1.msra.mxu0 0.0
        %989 = vmatprep.subr.mxu0 0.0
        %990 = vmatpush1.msra.mxu0 0.0
        %991 = vmatprep.subr.mxu0 0.0
        %992 = vmatpush1.msra.mxu0 0.0
        %993 = vmatprep.subr.mxu0 0.0
        %994 = vmatpush1.msra.mxu0 0.0
        %995 = vmatprep.subr.mxu0 0.0
        %996 = vmatpush1.msra.mxu0 0.0
        %997 = vmatprep.subr.mxu0 0.0
        %998 = vmatpush1.msra.mxu0 0.0
        %999 = vmatprep.subr.mxu0 0.0
        %1000 = vmatpush1.msra.mxu0 0.0
        %1001 = vmatprep.subr.mxu0 0.0
        %1002 = vmatpush1.msra.mxu0 0.0
        %1003 = vmatprep.subr.mxu0 0.0
        %1004 = vmatpush1.msra.mxu0 0.0
        %1005 = vmatprep.subr.mxu0 0.0
        %1006 = vmatpush1.msra.mxu0 0.0
        %1007 = vmatprep.subr.mxu0 0.0
        %1008 = vmatpush1.msra.mxu0 0.0
        %1009 = vmatprep.subr.mxu0 0.0
        %1010 = vmatpush1.msra.mxu0 0.0
        %1011 = vmatprep.subr.mxu0 0.0
        %1012 = vmatpush1.msra.mxu0 0.0
        %1013 = vmatprep.subr.mxu0 0.0
        %1014 = vmatpush1.msra.mxu0 0.0
        %1015 = vmatprep.subr.mxu0 0.0
        %1016 = vmatpush1.msra.mxu0 0.0
        %1017 = vmatprep.mubr.f32.mxu0 0.0
        %1018 = vmatmul.mubr.f32.gmra.mrb[0].mxu0 %v951
        %v1019 = vpop.f32.mrb[0].mxu0
        %v1020 = vadd.f32 0.0, %v1019
        %v1021 = vpop.f32.mrb[0].mxu0
        %1022 = vdwg.mxu0
        %s1023 = scalar_lea.vmem %s4, 8
        %v1024 = vld [vmem:[%s1023] sm:$0xff]
        %v1026 = vsel %vm474, %v1020, 0
        %1028 = vmatprep.subr.mxu0 0.0
        %1029 = vmatpush1.msra.mxu0 %v1024
        %1030 = vmatprep.subr.mxu0 0.0
        %1031 = vmatpush1.msra.mxu0 0.0
        %1032 = vmatprep.subr.mxu0 0.0
        %1033 = vmatpush1.msra.mxu0 0.0
        %1034 = vmatprep.subr.mxu0 0.0
        %1035 = vmatpush1.msra.mxu0 0.0
        %1036 = vmatprep.subr.mxu0 0.0
        %1037 = vmatpush1.msra.mxu0 0.0
        %1038 = vmatprep.subr.mxu0 0.0
        %1039 = vmatpush1.msra.mxu0 0.0
        %1040 = vmatprep.subr.mxu0 0.0
        %1041 = vmatpush1.msra.mxu0 0.0
        %1042 = vmatprep.subr.mxu0 0.0
        %1043 = vmatpush1.msra.mxu0 0.0
        %1044 = vmatprep.subr.mxu0 0.0
        %1045 = vmatpush1.msra.mxu0 0.0
        %1046 = vmatprep.subr.mxu0 0.0
        %1047 = vmatpush1.msra.mxu0 0.0
        %1048 = vmatprep.subr.mxu0 0.0
        %1049 = vmatpush1.msra.mxu0 0.0
        %1050 = vmatprep.subr.mxu0 0.0
        %1051 = vmatpush1.msra.mxu0 0.0
        %1052 = vmatprep.subr.mxu0 0.0
        %1053 = vmatpush1.msra.mxu0 0.0
        %1054 = vmatprep.subr.mxu0 0.0
        %1055 = vmatpush1.msra.mxu0 0.0
        %1056 = vmatprep.subr.mxu0 0.0
        %1057 = vmatpush1.msra.mxu0 0.0
        %1058 = vmatprep.subr.mxu0 0.0
        %1059 = vmatpush1.msra.mxu0 0.0
        %1060 = vmatprep.subr.mxu0 0.0
        %1061 = vmatpush1.msra.mxu0 0.0
        %1062 = vmatprep.subr.mxu0 0.0
        %1063 = vmatpush1.msra.mxu0 0.0
        %1064 = vmatprep.subr.mxu0 0.0
        %1065 = vmatpush1.msra.mxu0 0.0
        %1066 = vmatprep.subr.mxu0 0.0
        %1067 = vmatpush1.msra.mxu0 0.0
        %1068 = vmatprep.subr.mxu0 0.0
        %1069 = vmatpush1.msra.mxu0 0.0
        %1070 = vmatprep.subr.mxu0 0.0
        %1071 = vmatpush1.msra.mxu0 0.0
        %1072 = vmatprep.subr.mxu0 0.0
        %1073 = vmatpush1.msra.mxu0 0.0
        %1074 = vmatprep.subr.mxu0 0.0
        %1075 = vmatpush1.msra.mxu0 0.0
        %1076 = vmatprep.subr.mxu0 0.0
        %1077 = vmatpush1.msra.mxu0 0.0
        %1078 = vmatprep.subr.mxu0 0.0
        %1079 = vmatpush1.msra.mxu0 0.0
        %1080 = vmatprep.subr.mxu0 0.0
        %1081 = vmatpush1.msra.mxu0 0.0
        %1082 = vmatprep.subr.mxu0 0.0
        %1083 = vmatpush1.msra.mxu0 0.0
        %1084 = vmatprep.subr.mxu0 0.0
        %1085 = vmatpush1.msra.mxu0 0.0
        %1086 = vmatprep.subr.mxu0 0.0
        %1087 = vmatpush1.msra.mxu0 0.0
        %1088 = vmatprep.subr.mxu0 0.0
        %1089 = vmatpush1.msra.mxu0 0.0
        %1090 = vmatprep.subr.mxu0 0.0
        %1091 = vmatpush1.msra.mxu0 0.0
        %1092 = vmatprep.mubr.f32.mxu0 0.0
        %1093 = vmatmul.mubr.f32.gmra.mrb[0].mxu0 %v1026
        %v1094 = vpop.f32.mrb[0].mxu0
        %v1095 = vadd.f32 0.0, %v1094
        %v1096 = vpop.f32.mrb[0].mxu0
        %1097 = vdwg.mxu0
        %v1099 = vsel %vm474, %v633, 0
        %1101 = vmatprep.subr.mxu0 0.0
        %1102 = vmatpush1.msra.mxu0 %v636
        %1103 = vmatprep.subr.mxu0 0.0
        %1104 = vmatpush1.msra.mxu0 0.0
        %1105 = vmatprep.subr.mxu0 0.0
        %1106 = vmatpush1.msra.mxu0 0.0
        %1107 = vmatprep.subr.mxu0 0.0
        %1108 = vmatpush1.msra.mxu0 0.0
        %1109 = vmatprep.subr.mxu0 0.0
        %1110 = vmatpush1.msra.mxu0 0.0
        %1111 = vmatprep.subr.mxu0 0.0
        %1112 = vmatpush1.msra.mxu0 0.0
        %1113 = vmatprep.subr.mxu0 0.0
        %1114 = vmatpush1.msra.mxu0 0.0
        %1115 = vmatprep.subr.mxu0 0.0
        %1116 = vmatpush1.msra.mxu0 0.0
        %1117 = vmatprep.subr.mxu0 0.0
        %1118 = vmatpush1.msra.mxu0 0.0
        %1119 = vmatprep.subr.mxu0 0.0
        %1120 = vmatpush1.msra.mxu0 0.0
        %1121 = vmatprep.subr.mxu0 0.0
        %1122 = vmatpush1.msra.mxu0 0.0
        %1123 = vmatprep.subr.mxu0 0.0
        %1124 = vmatpush1.msra.mxu0 0.0
        %1125 = vmatprep.subr.mxu0 0.0
        %1126 = vmatpush1.msra.mxu0 0.0
        %1127 = vmatprep.subr.mxu0 0.0
        %1128 = vmatpush1.msra.mxu0 0.0
        %1129 = vmatprep.subr.mxu0 0.0
        %1130 = vmatpush1.msra.mxu0 0.0
        %1131 = vmatprep.subr.mxu0 0.0
        %1132 = vmatpush1.msra.mxu0 0.0
        %1133 = vmatprep.subr.mxu0 0.0
        %1134 = vmatpush1.msra.mxu0 0.0
        %1135 = vmatprep.subr.mxu0 0.0
        %1136 = vmatpush1.msra.mxu0 0.0
        %1137 = vmatprep.subr.mxu0 0.0
        %1138 = vmatpush1.msra.mxu0 0.0
        %1139 = vmatprep.subr.mxu0 0.0
        %1140 = vmatpush1.msra.mxu0 0.0
        %1141 = vmatprep.subr.mxu0 0.0
        %1142 = vmatpush1.msra.mxu0 0.0
        %1143 = vmatprep.subr.mxu0 0.0
        %1144 = vmatpush1.msra.mxu0 0.0
        %1145 = vmatprep.subr.mxu0 0.0
        %1146 = vmatpush1.msra.mxu0 0.0
        %1147 = vmatprep.subr.mxu0 0.0
        %1148 = vmatpush1.msra.mxu0 0.0
        %1149 = vmatprep.subr.mxu0 0.0
        %1150 = vmatpush1.msra.mxu0 0.0
        %1151 = vmatprep.subr.mxu0 0.0
        %1152 = vmatpush1.msra.mxu0 0.0
        %1153 = vmatprep.subr.mxu0 0.0
        %1154 = vmatpush1.msra.mxu0 0.0
        %1155 = vmatprep.subr.mxu0 0.0
        %1156 = vmatpush1.msra.mxu0 0.0
        %1157 = vmatprep.subr.mxu0 0.0
        %1158 = vmatpush1.msra.mxu0 0.0
        %1159 = vmatprep.subr.mxu0 0.0
        %1160 = vmatpush1.msra.mxu0 0.0
        %1161 = vmatprep.subr.mxu0 0.0
        %1162 = vmatpush1.msra.mxu0 0.0
        %1163 = vmatprep.subr.mxu0 0.0
        %1164 = vmatpush1.msra.mxu0 0.0
        %1165 = vmatprep.mubr.f32.mxu0 0.0
        %1166 = vmatmul.mubr.f32.gmra.mrb[0].mxu0 %v1099
        %v1167 = vpop.f32.mrb[0].mxu0
        %v1168 = vadd.f32 %v1095, %v1167
        %v1169 = vpop.f32.mrb[0].mxu0
        %1170 = vdwg.mxu0
        %s1171 = scalar_lea.vmem %s1, 64
        %v1172 = vld [vmem:[%s1171] sm:$0xff]
        %v1173 = vld [vmem:[%s1171 + $0x8] sm:$0xff]
        %v1174 = vld [vmem:[%s1171 + $0x10] sm:$0xff]
        %v1175 = vld [vmem:[%s1171 + $0x18] sm:$0xff]
        %1176 = vmatprep.subr.mxu0 0.0
        %1177 = vmatpush1.msra.mxu0 %v1172
        %1178 = vmatprep.subr.mxu0 0.0
        %1179 = vmatpush1.msra.mxu0 %v1173
        %1180 = vmatprep.subr.mxu0 0.0
        %1181 = vmatpush1.msra.mxu0 %v1174
        %1182 = vmatprep.subr.mxu0 0.0
        %1183 = vmatpush1.msra.mxu0 %v1175
        %1184 = vmatprep.subr.mxu0 0.0
        %1185 = vmatpush1.msra.mxu0 0.0
        %1186 = vmatprep.subr.mxu0 0.0
        %1187 = vmatpush1.msra.mxu0 0.0
        %1188 = vmatprep.subr.mxu0 0.0
        %1189 = vmatpush1.msra.mxu0 0.0
        %1190 = vmatprep.subr.mxu0 0.0
        %1191 = vmatpush1.msra.mxu0 0.0
        %1192 = vmatprep.subr.mxu0 0.0
        %1193 = vmatpush1.msra.mxu0 0.0
        %1194 = vmatprep.subr.mxu0 0.0
        %1195 = vmatpush1.msra.mxu0 0.0
        %1196 = vmatprep.subr.mxu0 0.0
        %1197 = vmatpush1.msra.mxu0 0.0
        %1198 = vmatprep.subr.mxu0 0.0
        %1199 = vmatpush1.msra.mxu0 0.0
        %1200 = vmatprep.subr.mxu0 0.0
        %1201 = vmatpush1.msra.mxu0 0.0
        %1202 = vmatprep.subr.mxu0 0.0
        %1203 = vmatpush1.msra.mxu0 0.0
        %1204 = vmatprep.subr.mxu0 0.0
        %1205 = vmatpush1.msra.mxu0 0.0
        %1206 = vmatprep.subr.mxu0 0.0
        %1207 = vmatpush1.msra.mxu0 0.0
        %1208 = vmatprep.subr.mxu0 0.0
        %1209 = vmatpush1.msra.mxu0 0.0
        %1210 = vmatprep.subr.mxu0 0.0
        %1211 = vmatpush1.msra.mxu0 0.0
        %1212 = vmatprep.subr.mxu0 0.0
        %1213 = vmatpush1.msra.mxu0 0.0
        %1214 = vmatprep.subr.mxu0 0.0
        %1215 = vmatpush1.msra.mxu0 0.0
        %1216 = vmatprep.subr.mxu0 0.0
        %1217 = vmatpush1.msra.mxu0 0.0
        %1218 = vmatprep.subr.mxu0 0.0
        %1219 = vmatpush1.msra.mxu0 0.0
        %1220 = vmatprep.subr.mxu0 0.0
        %1221 = vmatpush1.msra.mxu0 0.0
        %1222 = vmatprep.subr.mxu0 0.0
        %1223 = vmatpush1.msra.mxu0 0.0
        %1224 = vmatprep.subr.mxu0 0.0
        %1225 = vmatpush1.msra.mxu0 0.0
        %1226 = vmatprep.subr.mxu0 0.0
        %1227 = vmatpush1.msra.mxu0 0.0
        %1228 = vmatprep.subr.mxu0 0.0
        %1229 = vmatpush1.msra.mxu0 0.0
        %1230 = vmatprep.subr.mxu0 0.0
        %1231 = vmatpush1.msra.mxu0 0.0
        %1232 = vmatprep.subr.mxu0 0.0
        %1233 = vmatpush1.msra.mxu0 0.0
        %1234 = vmatprep.subr.mxu0 0.0
        %1235 = vmatpush1.msra.mxu0 0.0
        %1236 = vmatprep.subr.mxu0 0.0
        %1237 = vmatpush1.msra.mxu0 0.0
        %1238 = vmatprep.subr.mxu0 0.0
        %1239 = vmatpush1.msra.mxu0 0.0
        %1240 = vmatprep.mubr.f32.mxu0 0.0
        %1241 = vmatmul.mubr.f32.gmra.mrb[0].mxu0 %v254
        %v1242 = vpop.f32.mrb[0].mxu0
        %v1243 = vadd.f32 0.0, %v1242
        %v1244 = vpop.f32.mrb[0].mxu0
        %1245 = vdwg.mxu0
        %s1246 = scalar_lea.vmem %s2, 64
        %v1247 = vld [vmem:[%s1246] sm:$0xff]
        %v1248 = vld [vmem:[%s1246 + $0x8] sm:$0xff]
        %v1249 = vld [vmem:[%s1246 + $0x10] sm:$0xff]
        %v1250 = vld [vmem:[%s1246 + $0x18] sm:$0xff]
        %1251 = vmatprep.subr.mxu0 0.0
        %1252 = vmatpush1.msra.mxu0 %v1247
        %1253 = vmatprep.subr.mxu0 0.0
        %1254 = vmatpush1.msra.mxu0 %v1248
        %1255 = vmatprep.subr.mxu0 0.0
        %1256 = vmatpush1.msra.mxu0 %v1249
        %1257 = vmatprep.subr.mxu0 0.0
        %1258 = vmatpush1.msra.mxu0 %v1250
        %1259 = vmatprep.subr.mxu0 0.0
        %1260 = vmatpush1.msra.mxu0 0.0
        %1261 = vmatprep.subr.mxu0 0.0
        %1262 = vmatpush1.msra.mxu0 0.0
        %1263 = vmatprep.subr.mxu0 0.0
        %1264 = vmatpush1.msra.mxu0 0.0
        %1265 = vmatprep.subr.mxu0 0.0
        %1266 = vmatpush1.msra.mxu0 0.0
        %1267 = vmatprep.subr.mxu0 0.0
        %1268 = vmatpush1.msra.mxu0 0.0
        %1269 = vmatprep.subr.mxu0 0.0
        %1270 = vmatpush1.msra.mxu0 0.0
        %1271 = vmatprep.subr.mxu0 0.0
        %1272 = vmatpush1.msra.mxu0 0.0
        %1273 = vmatprep.subr.mxu0 0.0
        %1274 = vmatpush1.msra.mxu0 0.0
        %1275 = vmatprep.subr.mxu0 0.0
        %1276 = vmatpush1.msra.mxu0 0.0
        %1277 = vmatprep.subr.mxu0 0.0
        %1278 = vmatpush1.msra.mxu0 0.0
        %1279 = vmatprep.subr.mxu0 0.0
        %1280 = vmatpush1.msra.mxu0 0.0
        %1281 = vmatprep.subr.mxu0 0.0
        %1282 = vmatpush1.msra.mxu0 0.0
        %1283 = vmatprep.subr.mxu0 0.0
        %1284 = vmatpush1.msra.mxu0 0.0
        %1285 = vmatprep.subr.mxu0 0.0
        %1286 = vmatpush1.msra.mxu0 0.0
        %1287 = vmatprep.subr.mxu0 0.0
        %1288 = vmatpush1.msra.mxu0 0.0
        %1289 = vmatprep.subr.mxu0 0.0
        %1290 = vmatpush1.msra.mxu0 0.0
        %1291 = vmatprep.subr.mxu0 0.0
        %1292 = vmatpush1.msra.mxu0 0.0
        %1293 = vmatprep.subr.mxu0 0.0
        %1294 = vmatpush1.msra.mxu0 0.0
        %1295 = vmatprep.subr.mxu0 0.0
        %1296 = vmatpush1.msra.mxu0 0.0
        %1297 = vmatprep.subr.mxu0 0.0
        %1298 = vmatpush1.msra.mxu0 0.0
        %1299 = vmatprep.subr.mxu0 0.0
        %1300 = vmatpush1.msra.mxu0 0.0
        %1301 = vmatprep.subr.mxu0 0.0
        %1302 = vmatpush1.msra.mxu0 0.0
        %1303 = vmatprep.subr.mxu0 0.0
        %1304 = vmatpush1.msra.mxu0 0.0
        %1305 = vmatprep.subr.mxu0 0.0
        %1306 = vmatpush1.msra.mxu0 0.0
        %1307 = vmatprep.subr.mxu0 0.0
        %1308 = vmatpush1.msra.mxu0 0.0
        %1309 = vmatprep.subr.mxu0 0.0
        %1310 = vmatpush1.msra.mxu0 0.0
        %1311 = vmatprep.subr.mxu0 0.0
        %1312 = vmatpush1.msra.mxu0 0.0
        %1313 = vmatprep.subr.mxu0 0.0
        %1314 = vmatpush1.msra.mxu0 0.0
        %1315 = vmatprep.mubr.f32.mxu0 0.0
        %1316 = vmatmul.mubr.f32.gmra.mrb[0].mxu0 %v254
        %v1317 = vpop.f32.mrb[0].mxu0
        %v1318 = vadd.f32 0.0, %v1317
        %v1319 = vpop.f32.mrb[0].mxu0
        %1320 = vdwg.mxu0
        %s1321 = scalar_lea.vmem %s3, 64
        %v1322 = vld [vmem:[%s1321] sm:$0xff]
        %v1323 = vld [vmem:[%s1321 + $0x8] sm:$0xff]
        %v1324 = vld [vmem:[%s1321 + $0x10] sm:$0xff]
        %v1325 = vld [vmem:[%s1321 + $0x18] sm:$0xff]
        %1326 = vmatprep.subr.mxu0 0.0
        %1327 = vmatpush1.msra.mxu0 %v1322
        %1328 = vmatprep.subr.mxu0 0.0
        %1329 = vmatpush1.msra.mxu0 %v1323
        %1330 = vmatprep.subr.mxu0 0.0
        %1331 = vmatpush1.msra.mxu0 %v1324
        %1332 = vmatprep.subr.mxu0 0.0
        %1333 = vmatpush1.msra.mxu0 %v1325
        %1334 = vmatprep.subr.mxu0 0.0
        %1335 = vmatpush1.msra.mxu0 0.0
        %1336 = vmatprep.subr.mxu0 0.0
        %1337 = vmatpush1.msra.mxu0 0.0
        %1338 = vmatprep.subr.mxu0 0.0
        %1339 = vmatpush1.msra.mxu0 0.0
        %1340 = vmatprep.subr.mxu0 0.0
        %1341 = vmatpush1.msra.mxu0 0.0
        %1342 = vmatprep.subr.mxu0 0.0
        %1343 = vmatpush1.msra.mxu0 0.0
        %1344 = vmatprep.subr.mxu0 0.0
        %1345 = vmatpush1.msra.mxu0 0.0
        %1346 = vmatprep.subr.mxu0 0.0
        %1347 = vmatpush1.msra.mxu0 0.0
        %1348 = vmatprep.subr.mxu0 0.0
        %1349 = vmatpush1.msra.mxu0 0.0
        %1350 = vmatprep.subr.mxu0 0.0
        %1351 = vmatpush1.msra.mxu0 0.0
        %1352 = vmatprep.subr.mxu0 0.0
        %1353 = vmatpush1.msra.mxu0 0.0
        %1354 = vmatprep.subr.mxu0 0.0
        %1355 = vmatpush1.msra.mxu0 0.0
        %1356 = vmatprep.subr.mxu0 0.0
        %1357 = vmatpush1.msra.mxu0 0.0
        %1358 = vmatprep.subr.mxu0 0.0
        %1359 = vmatpush1.msra.mxu0 0.0
        %1360 = vmatprep.subr.mxu0 0.0
        %1361 = vmatpush1.msra.mxu0 0.0
        %1362 = vmatprep.subr.mxu0 0.0
        %1363 = vmatpush1.msra.mxu0 0.0
        %1364 = vmatprep.subr.mxu0 0.0
        %1365 = vmatpush1.msra.mxu0 0.0
        %1366 = vmatprep.subr.mxu0 0.0
        %1367 = vmatpush1.msra.mxu0 0.0
        %1368 = vmatprep.subr.mxu0 0.0
        %1369 = vmatpush1.msra.mxu0 0.0
        %1370 = vmatprep.subr.mxu0 0.0
        %1371 = vmatpush1.msra.mxu0 0.0
        %1372 = vmatprep.subr.mxu0 0.0
        %1373 = vmatpush1.msra.mxu0 0.0
        %1374 = vmatprep.subr.mxu0 0.0
        %1375 = vmatpush1.msra.mxu0 0.0
        %1376 = vmatprep.subr.mxu0 0.0
        %1377 = vmatpush1.msra.mxu0 0.0
        %1378 = vmatprep.subr.mxu0 0.0
        %1379 = vmatpush1.msra.mxu0 0.0
        %1380 = vmatprep.subr.mxu0 0.0
        %1381 = vmatpush1.msra.mxu0 0.0
        %1382 = vmatprep.subr.mxu0 0.0
        %1383 = vmatpush1.msra.mxu0 0.0
        %1384 = vmatprep.subr.mxu0 0.0
        %1385 = vmatpush1.msra.mxu0 0.0
        %1386 = vmatprep.subr.mxu0 0.0
        %1387 = vmatpush1.msra.mxu0 0.0
        %1388 = vmatprep.subr.mxu0 0.0
        %1389 = vmatpush1.msra.mxu0 0.0
        %1390 = vmatprep.mubr.f32.mxu0 0.0
        %1391 = vmatmul.mubr.f32.gmra.mrb[0].mxu0 %v254
        %v1392 = vpop.f32.mrb[0].mxu0
        %v1393 = vadd.f32 0.0, %v1392
        %v1394 = vpop.f32.mrb[0].mxu0
        %1395 = vdwg.mxu0
        %v1397 = vsel %vm474, %v1243, 0
        %v1400 = vsel %vm474, %v1318, 0
        %1402 = vmatprep.subr.mxu0 0.0
        %1403 = vmatpush1.xpose.msra.mxu0 %v1400
        %1404 = vmatprep.subr.mxu0 0.0
        %1405 = vmatpush1.xpose.msra.mxu0 0.0
        %1406 = vmatprep.subr.mxu0 0.0
        %1407 = vmatpush1.xpose.msra.mxu0 0.0
        %1408 = vmatprep.subr.mxu0 0.0
        %1409 = vmatpush1.xpose.msra.mxu0 0.0
        %1410 = vmatprep.subr.mxu0 0.0
        %1411 = vmatpush1.xpose.msra.mxu0 0.0
        %1412 = vmatprep.subr.mxu0 0.0
        %1413 = vmatpush1.xpose.msra.mxu0 0.0
        %1414 = vmatprep.subr.mxu0 0.0
        %1415 = vmatpush1.xpose.msra.mxu0 0.0
        %1416 = vmatprep.subr.mxu0 0.0
        %1417 = vmatpush1.xpose.msra.mxu0 0.0
        %1418 = vmatprep.subr.mxu0 0.0
        %1419 = vmatpush1.xpose.msra.mxu0 0.0
        %1420 = vmatprep.subr.mxu0 0.0
        %1421 = vmatpush1.xpose.msra.mxu0 0.0
        %1422 = vmatprep.subr.mxu0 0.0
        %1423 = vmatpush1.xpose.msra.mxu0 0.0
        %1424 = vmatprep.subr.mxu0 0.0
        %1425 = vmatpush1.xpose.msra.mxu0 0.0
        %1426 = vmatprep.subr.mxu0 0.0
        %1427 = vmatpush1.xpose.msra.mxu0 0.0
        %1428 = vmatprep.subr.mxu0 0.0
        %1429 = vmatpush1.xpose.msra.mxu0 0.0
        %1430 = vmatprep.subr.mxu0 0.0
        %1431 = vmatpush1.xpose.msra.mxu0 0.0
        %1432 = vmatprep.subr.mxu0 0.0
        %1433 = vmatpush1.xpose.msra.mxu0 0.0
        %1434 = vmatprep.subr.mxu0 0.0
        %1435 = vmatpush1.xpose.msra.mxu0 0.0
        %1436 = vmatprep.subr.mxu0 0.0
        %1437 = vmatpush1.xpose.msra.mxu0 0.0
        %1438 = vmatprep.subr.mxu0 0.0
        %1439 = vmatpush1.xpose.msra.mxu0 0.0
        %1440 = vmatprep.subr.mxu0 0.0
        %1441 = vmatpush1.xpose.msra.mxu0 0.0
        %1442 = vmatprep.subr.mxu0 0.0
        %1443 = vmatpush1.xpose.msra.mxu0 0.0
        %1444 = vmatprep.subr.mxu0 0.0
        %1445 = vmatpush1.xpose.msra.mxu0 0.0
        %1446 = vmatprep.subr.mxu0 0.0
        %1447 = vmatpush1.xpose.msra.mxu0 0.0
        %1448 = vmatprep.subr.mxu0 0.0
        %1449 = vmatpush1.xpose.msra.mxu0 0.0
        %1450 = vmatprep.subr.mxu0 0.0
        %1451 = vmatpush1.xpose.msra.mxu0 0.0
        %1452 = vmatprep.subr.mxu0 0.0
        %1453 = vmatpush1.xpose.msra.mxu0 0.0
        %1454 = vmatprep.subr.mxu0 0.0
        %1455 = vmatpush1.xpose.msra.mxu0 0.0
        %1456 = vmatprep.subr.mxu0 0.0
        %1457 = vmatpush1.xpose.msra.mxu0 0.0
        %1458 = vmatprep.subr.mxu0 0.0
        %1459 = vmatpush1.xpose.msra.mxu0 0.0
        %1460 = vmatprep.subr.mxu0 0.0
        %1461 = vmatpush1.xpose.msra.mxu0 0.0
        %1462 = vmatprep.subr.mxu0 0.0
        %1463 = vmatpush1.xpose.msra.mxu0 0.0
        %1464 = vmatprep.subr.mxu0 0.0
        %1465 = vmatpush1.xpose.msra.mxu0 0.0
        %1466 = vmatprep.mubr.f32.mxu0 0.0
        %1467 = vmatmul.mubr.f32.gmra.mrb[0].mxu0 %v1397
        %v1468 = vpop.f32.mrb[0].mxu0
        %v1469 = vadd.f32 0.0, %v1468
        %v1470 = vpop.f32.mrb[0].mxu0
        %1471 = vdwg.mxu0
        %v1472 = vmax.f32 %v1469, 0.0
        %v1473 = vsel %vm474, %v1472, -inf
        %1474 = vmax.xlane.f32.xlu0 %v1473
        %v1475 = vpop.xlane.xlu0 %1474
        %v1476 = vsub.f32 %v1472, %v1475
        %v1477 = vmul.f32 %v1476, 1.442695
        %v1478 = vpow.pop %v1477
        %v1479 = vsel %vm474, %v1478, 0.0
        %1480 = vadd.xlane.f32.xlu0 %v1479
        %v1481 = vpop.xlane.xlu0 %1480
        %v1482 = vrcp.pop %v1481
        %v1483 = vmul.f32 %v1478, %v1482
        %v1485 = vsel %vm474, %v1483, 0
        %1487 = vmatprep.subr.mxu0 0.0
        %1488 = vmatpush1.msra.mxu0 %v1393
        %1489 = vmatprep.subr.mxu0 0.0
        %1490 = vmatpush1.msra.mxu0 0.0
        %1491 = vmatprep.subr.mxu0 0.0
        %1492 = vmatpush1.msra.mxu0 0.0
        %1493 = vmatprep.subr.mxu0 0.0
        %1494 = vmatpush1.msra.mxu0 0.0
        %1495 = vmatprep.subr.mxu0 0.0
        %1496 = vmatpush1.msra.mxu0 0.0
        %1497 = vmatprep.subr.mxu0 0.0
        %1498 = vmatpush1.msra.mxu0 0.0
        %1499 = vmatprep.subr.mxu0 0.0
        %1500 = vmatpush1.msra.mxu0 0.0
        %1501 = vmatprep.subr.mxu0 0.0
        %1502 = vmatpush1.msra.mxu0 0.0
        %1503 = vmatprep.subr.mxu0 0.0
        %1504 = vmatpush1.msra.mxu0 0.0
        %1505 = vmatprep.subr.mxu0 0.0
        %1506 = vmatpush1.msra.mxu0 0.0
        %1507 = vmatprep.subr.mxu0 0.0
        %1508 = vmatpush1.msra.mxu0 0.0
        %1509 = vmatprep.subr.mxu0 0.0
        %1510 = vmatpush1.msra.mxu0 0.0
        %1511 = vmatprep.subr.mxu0 0.0
        %1512 = vmatpush1.msra.mxu0 0.0
        %1513 = vmatprep.subr.mxu0 0.0
        %1514 = vmatpush1.msra.mxu0 0.0
        %1515 = vmatprep.subr.mxu0 0.0
        %1516 = vmatpush1.msra.mxu0 0.0
        %1517 = vmatprep.subr.mxu0 0.0
        %1518 = vmatpush1.msra.mxu0 0.0
        %1519 = vmatprep.subr.mxu0 0.0
        %1520 = vmatpush1.msra.mxu0 0.0
        %1521 = vmatprep.subr.mxu0 0.0
        %1522 = vmatpush1.msra.mxu0 0.0
        %1523 = vmatprep.subr.mxu0 0.0
        %1524 = vmatpush1.msra.mxu0 0.0
        %1525 = vmatprep.subr.mxu0 0.0
        %1526 = vmatpush1.msra.mxu0 0.0
        %1527 = vmatprep.subr.mxu0 0.0
        %1528 = vmatpush1.msra.mxu0 0.0
        %1529 = vmatprep.subr.mxu0 0.0
        %1530 = vmatpush1.msra.mxu0 0.0
        %1531 = vmatprep.subr.mxu0 0.0
        %1532 = vmatpush1.msra.mxu0 0.0
        %1533 = vmatprep.subr.mxu0 0.0
        %1534 = vmatpush1.msra.mxu0 0.0
        %1535 = vmatprep.subr.mxu0 0.0
        %1536 = vmatpush1.msra.mxu0 0.0
        %1537 = vmatprep.subr.mxu0 0.0
        %1538 = vmatpush1.msra.mxu0 0.0
        %1539 = vmatprep.subr.mxu0 0.0
        %1540 = vmatpush1.msra.mxu0 0.0
        %1541 = vmatprep.subr.mxu0 0.0
        %1542 = vmatpush1.msra.mxu0 0.0
        %1543 = vmatprep.subr.mxu0 0.0
        %1544 = vmatpush1.msra.mxu0 0.0
        %1545 = vmatprep.subr.mxu0 0.0
        %1546 = vmatpush1.msra.mxu0 0.0
        %1547 = vmatprep.subr.mxu0 0.0
        %1548 = vmatpush1.msra.mxu0 0.0
        %1549 = vmatprep.subr.mxu0 0.0
        %1550 = vmatpush1.msra.mxu0 0.0
        %1551 = vmatprep.mubr.f32.mxu0 0.0
        %1552 = vmatmul.mubr.f32.gmra.mrb[0].mxu0 %v1485
        %v1553 = vpop.f32.mrb[0].mxu0
        %v1554 = vadd.f32 0.0, %v1553
        %v1555 = vpop.f32.mrb[0].mxu0
        %1556 = vdwg.mxu0
        %s1557 = scalar_lea.vmem %s4, 16
        %v1558 = vld [vmem:[%s1557] sm:$0xff]
        %v1560 = vsel %vm474, %v1554, 0
        %1562 = vmatprep.subr.mxu0 0.0
        %1563 = vmatpush1.msra.mxu0 %v1558
        %1564 = vmatprep.subr.mxu0 0.0
        %1565 = vmatpush1.msra.mxu0 0.0
        %1566 = vmatprep.subr.mxu0 0.0
        %1567 = vmatpush1.msra.mxu0 0.0
        %1568 = vmatprep.subr.mxu0 0.0
        %1569 = vmatpush1.msra.mxu0 0.0
        %1570 = vmatprep.subr.mxu0 0.0
        %1571 = vmatpush1.msra.mxu0 0.0
        %1572 = vmatprep.subr.mxu0 0.0
        %1573 = vmatpush1.msra.mxu0 0.0
        %1574 = vmatprep.subr.mxu0 0.0
        %1575 = vmatpush1.msra.mxu0 0.0
        %1576 = vmatprep.subr.mxu0 0.0
        %1577 = vmatpush1.msra.mxu0 0.0
        %1578 = vmatprep.subr.mxu0 0.0
        %1579 = vmatpush1.msra.mxu0 0.0
        %1580 = vmatprep.subr.mxu0 0.0
        %1581 = vmatpush1.msra.mxu0 0.0
        %1582 = vmatprep.subr.mxu0 0.0
        %1583 = vmatpush1.msra.mxu0 0.0
        %1584 = vmatprep.subr.mxu0 0.0
        %1585 = vmatpush1.msra.mxu0 0.0
        %1586 = vmatprep.subr.mxu0 0.0
        %1587 = vmatpush1.msra.mxu0 0.0
        %1588 = vmatprep.subr.mxu0 0.0
        %1589 = vmatpush1.msra.mxu0 0.0
        %1590 = vmatprep.subr.mxu0 0.0
        %1591 = vmatpush1.msra.mxu0 0.0
        %1592 = vmatprep.subr.mxu0 0.0
        %1593 = vmatpush1.msra.mxu0 0.0
        %1594 = vmatprep.subr.mxu0 0.0
        %1595 = vmatpush1.msra.mxu0 0.0
        %1596 = vmatprep.subr.mxu0 0.0
        %1597 = vmatpush1.msra.mxu0 0.0
        %1598 = vmatprep.subr.mxu0 0.0
        %1599 = vmatpush1.msra.mxu0 0.0
        %1600 = vmatprep.subr.mxu0 0.0
        %1601 = vmatpush1.msra.mxu0 0.0
        %1602 = vmatprep.subr.mxu0 0.0
        %1603 = vmatpush1.msra.mxu0 0.0
        %1604 = vmatprep.subr.mxu0 0.0
        %1605 = vmatpush1.msra.mxu0 0.0
        %1606 = vmatprep.subr.mxu0 0.0
        %1607 = vmatpush1.msra.mxu0 0.0
        %1608 = vmatprep.subr.mxu0 0.0
        %1609 = vmatpush1.msra.mxu0 0.0
        %1610 = vmatprep.subr.mxu0 0.0
        %1611 = vmatpush1.msra.mxu0 0.0
        %1612 = vmatprep.subr.mxu0 0.0
        %1613 = vmatpush1.msra.mxu0 0.0
        %1614 = vmatprep.subr.mxu0 0.0
        %1615 = vmatpush1.msra.mxu0 0.0
        %1616 = vmatprep.subr.mxu0 0.0
        %1617 = vmatpush1.msra.mxu0 0.0
        %1618 = vmatprep.subr.mxu0 0.0
        %1619 = vmatpush1.msra.mxu0 0.0
        %1620 = vmatprep.subr.mxu0 0.0
        %1621 = vmatpush1.msra.mxu0 0.0
        %1622 = vmatprep.subr.mxu0 0.0
        %1623 = vmatpush1.msra.mxu0 0.0
        %1624 = vmatprep.subr.mxu0 0.0
        %1625 = vmatpush1.msra.mxu0 0.0
        %1626 = vmatprep.mubr.f32.mxu0 0.0
        %1627 = vmatmul.mubr.f32.gmra.mrb[0].mxu0 %v1560
        %v1628 = vpop.f32.mrb[0].mxu0
        %v1629 = vadd.f32 0.0, %v1628
        %v1630 = vpop.f32.mrb[0].mxu0
        %1631 = vdwg.mxu0
        %v1632 = vadd.f32 %v1168, %v1629
        %s1633 = scalar_lea.vmem %s1, 96
        %v1634 = vld [vmem:[%s1633] sm:$0xff]
        %v1635 = vld [vmem:[%s1633 + $0x8] sm:$0xff]
        %v1636 = vld [vmem:[%s1633 + $0x10] sm:$0xff]
        %v1637 = vld [vmem:[%s1633 + $0x18] sm:$0xff]
        %1638 = vmatprep.subr.mxu0 0.0
        %1639 = vmatpush1.msra.mxu0 %v1634
        %1640 = vmatprep.subr.mxu0 0.0
        %1641 = vmatpush1.msra.mxu0 %v1635
        %1642 = vmatprep.subr.mxu0 0.0
        %1643 = vmatpush1.msra.mxu0 %v1636
        %1644 = vmatprep.subr.mxu0 0.0
        %1645 = vmatpush1.msra.mxu0 %v1637
        %1646 = vmatprep.subr.mxu0 0.0
        %1647 = vmatpush1.msra.mxu0 0.0
        %1648 = vmatprep.subr.mxu0 0.0
        %1649 = vmatpush1.msra.mxu0 0.0
        %1650 = vmatprep.subr.mxu0 0.0
        %1651 = vmatpush1.msra.mxu0 0.0
        %1652 = vmatprep.subr.mxu0 0.0
        %1653 = vmatpush1.msra.mxu0 0.0
        %1654 = vmatprep.subr.mxu0 0.0
        %1655 = vmatpush1.msra.mxu0 0.0
        %1656 = vmatprep.subr.mxu0 0.0
        %1657 = vmatpush1.msra.mxu0 0.0
        %1658 = vmatprep.subr.mxu0 0.0
        %1659 = vmatpush1.msra.mxu0 0.0
        %1660 = vmatprep.subr.mxu0 0.0
        %1661 = vmatpush1.msra.mxu0 0.0
        %1662 = vmatprep.subr.mxu0 0.0
        %1663 = vmatpush1.msra.mxu0 0.0
        %1664 = vmatprep.subr.mxu0 0.0
        %1665 = vmatpush1.msra.mxu0 0.0
        %1666 = vmatprep.subr.mxu0 0.0
        %1667 = vmatpush1.msra.mxu0 0.0
        %1668 = vmatprep.subr.mxu0 0.0
        %1669 = vmatpush1.msra.mxu0 0.0
        %1670 = vmatprep.subr.mxu0 0.0
        %1671 = vmatpush1.msra.mxu0 0.0
        %1672 = vmatprep.subr.mxu0 0.0
        %1673 = vmatpush1.msra.mxu0 0.0
        %1674 = vmatprep.subr.mxu0 0.0
        %1675 = vmatpush1.msra.mxu0 0.0
        %1676 = vmatprep.subr.mxu0 0.0
        %1677 = vmatpush1.msra.mxu0 0.0
        %1678 = vmatprep.subr.mxu0 0.0
        %1679 = vmatpush1.msra.mxu0 0.0
        %1680 = vmatprep.subr.mxu0 0.0
        %1681 = vmatpush1.msra.mxu0 0.0
        %1682 = vmatprep.subr.mxu0 0.0
        %1683 = vmatpush1.msra.mxu0 0.0
        %1684 = vmatprep.subr.mxu0 0.0
        %1685 = vmatpush1.msra.mxu0 0.0
        %1686 = vmatprep.subr.mxu0 0.0
        %1687 = vmatpush1.msra.mxu0 0.0
        %1688 = vmatprep.subr.mxu0 0.0
        %1689 = vmatpush1.msra.mxu0 0.0
        %1690 = vmatprep.subr.mxu0 0.0
        %1691 = vmatpush1.msra.mxu0 0.0
        %1692 = vmatprep.subr.mxu0 0.0
        %1693 = vmatpush1.msra.mxu0 0.0
        %1694 = vmatprep.subr.mxu0 0.0
        %1695 = vmatpush1.msra.mxu0 0.0
        %1696 = vmatprep.subr.mxu0 0.0
        %1697 = vmatpush1.msra.mxu0 0.0
        %1698 = vmatprep.subr.mxu0 0.0
        %1699 = vmatpush1.msra.mxu0 0.0
        %1700 = vmatprep.subr.mxu0 0.0
        %1701 = vmatpush1.msra.mxu0 0.0
        %1702 = vmatprep.mubr.f32.mxu0 0.0
        %1703 = vmatmul.mubr.f32.gmra.mrb[0].mxu0 %v254
        %v1704 = vpop.f32.mrb[0].mxu0
        %v1705 = vadd.f32 0.0, %v1704
        %v1706 = vpop.f32.mrb[0].mxu0
        %1707 = vdwg.mxu0
        %s1708 = scalar_lea.vmem %s2, 96
        %v1709 = vld [vmem:[%s1708] sm:$0xff]
        %v1710 = vld [vmem:[%s1708 + $0x8] sm:$0xff]
        %v1711 = vld [vmem:[%s1708 + $0x10] sm:$0xff]
        %v1712 = vld [vmem:[%s1708 + $0x18] sm:$0xff]
        %1713 = vmatprep.subr.mxu0 0.0
        %1714 = vmatpush1.msra.mxu0 %v1709
        %1715 = vmatprep.subr.mxu0 0.0
        %1716 = vmatpush1.msra.mxu0 %v1710
        %1717 = vmatprep.subr.mxu0 0.0
        %1718 = vmatpush1.msra.mxu0 %v1711
        %1719 = vmatprep.subr.mxu0 0.0
        %1720 = vmatpush1.msra.mxu0 %v1712
        %1721 = vmatprep.subr.mxu0 0.0
        %1722 = vmatpush1.msra.mxu0 0.0
        %1723 = vmatprep.subr.mxu0 0.0
        %1724 = vmatpush1.msra.mxu0 0.0
        %1725 = vmatprep.subr.mxu0 0.0
        %1726 = vmatpush1.msra.mxu0 0.0
        %1727 = vmatprep.subr.mxu0 0.0
        %1728 = vmatpush1.msra.mxu0 0.0
        %1729 = vmatprep.subr.mxu0 0.0
        %1730 = vmatpush1.msra.mxu0 0.0
        %1731 = vmatprep.subr.mxu0 0.0
        %1732 = vmatpush1.msra.mxu0 0.0
        %1733 = vmatprep.subr.mxu0 0.0
        %1734 = vmatpush1.msra.mxu0 0.0
        %1735 = vmatprep.subr.mxu0 0.0
        %1736 = vmatpush1.msra.mxu0 0.0
        %1737 = vmatprep.subr.mxu0 0.0
        %1738 = vmatpush1.msra.mxu0 0.0
        %1739 = vmatprep.subr.mxu0 0.0
        %1740 = vmatpush1.msra.mxu0 0.0
        %1741 = vmatprep.subr.mxu0 0.0
        %1742 = vmatpush1.msra.mxu0 0.0
        %1743 = vmatprep.subr.mxu0 0.0
        %1744 = vmatpush1.msra.mxu0 0.0
        %1745 = vmatprep.subr.mxu0 0.0
        %1746 = vmatpush1.msra.mxu0 0.0
        %1747 = vmatprep.subr.mxu0 0.0
        %1748 = vmatpush1.msra.mxu0 0.0
        %1749 = vmatprep.subr.mxu0 0.0
        %1750 = vmatpush1.msra.mxu0 0.0
        %1751 = vmatprep.subr.mxu0 0.0
        %1752 = vmatpush1.msra.mxu0 0.0
        %1753 = vmatprep.subr.mxu0 0.0
        %1754 = vmatpush1.msra.mxu0 0.0
        %1755 = vmatprep.subr.mxu0 0.0
        %1756 = vmatpush1.msra.mxu0 0.0
        %1757 = vmatprep.subr.mxu0 0.0
        %1758 = vmatpush1.msra.mxu0 0.0
        %1759 = vmatprep.subr.mxu0 0.0
        %1760 = vmatpush1.msra.mxu0 0.0
        %1761 = vmatprep.subr.mxu0 0.0
        %1762 = vmatpush1.msra.mxu0 0.0
        %1763 = vmatprep.subr.mxu0 0.0
        %1764 = vmatpush1.msra.mxu0 0.0
        %1765 = vmatprep.subr.mxu0 0.0
        %1766 = vmatpush1.msra.mxu0 0.0
        %1767 = vmatprep.subr.mxu0 0.0
        %1768 = vmatpush1.msra.mxu0 0.0
        %1769 = vmatprep.subr.mxu0 0.0
        %1770 = vmatpush1.msra.mxu0 0.0
        %1771 = vmatprep.subr.mxu0 0.0
        %1772 = vmatpush1.msra.mxu0 0.0
        %1773 = vmatprep.subr.mxu0 0.0
        %1774 = vmatpush1.msra.mxu0 0.0
        %1775 = vmatprep.subr.mxu0 0.0
        %1776 = vmatpush1.msra.mxu0 0.0
        %1777 = vmatprep.mubr.f32.mxu0 0.0
        %1778 = vmatmul.mubr.f32.gmra.mrb[0].mxu0 %v254
        %v1779 = vpop.f32.mrb[0].mxu0
        %v1780 = vadd.f32 0.0, %v1779
        %v1781 = vpop.f32.mrb[0].mxu0
        %1782 = vdwg.mxu0
        %s1783 = scalar_lea.vmem %s3, 96
        %v1784 = vld [vmem:[%s1783] sm:$0xff]
        %v1785 = vld [vmem:[%s1783 + $0x8] sm:$0xff]
        %v1786 = vld [vmem:[%s1783 + $0x10] sm:$0xff]
        %v1787 = vld [vmem:[%s1783 + $0x18] sm:$0xff]
        %1788 = vmatprep.subr.mxu0 0.0
        %1789 = vmatpush1.msra.mxu0 %v1784
        %1790 = vmatprep.subr.mxu0 0.0
        %1791 = vmatpush1.msra.mxu0 %v1785
        %1792 = vmatprep.subr.mxu0 0.0
        %1793 = vmatpush1.msra.mxu0 %v1786
        %1794 = vmatprep.subr.mxu0 0.0
        %1795 = vmatpush1.msra.mxu0 %v1787
        %1796 = vmatprep.subr.mxu0 0.0
        %1797 = vmatpush1.msra.mxu0 0.0
        %1798 = vmatprep.subr.mxu0 0.0
        %1799 = vmatpush1.msra.mxu0 0.0
        %1800 = vmatprep.subr.mxu0 0.0
        %1801 = vmatpush1.msra.mxu0 0.0
        %1802 = vmatprep.subr.mxu0 0.0
        %1803 = vmatpush1.msra.mxu0 0.0
        %1804 = vmatprep.subr.mxu0 0.0
        %1805 = vmatpush1.msra.mxu0 0.0
        %1806 = vmatprep.subr.mxu0 0.0
        %1807 = vmatpush1.msra.mxu0 0.0
        %1808 = vmatprep.subr.mxu0 0.0
        %1809 = vmatpush1.msra.mxu0 0.0
        %1810 = vmatprep.subr.mxu0 0.0
        %1811 = vmatpush1.msra.mxu0 0.0
        %1812 = vmatprep.subr.mxu0 0.0
        %1813 = vmatpush1.msra.mxu0 0.0
        %1814 = vmatprep.subr.mxu0 0.0
        %1815 = vmatpush1.msra.mxu0 0.0
        %1816 = vmatprep.subr.mxu0 0.0
        %1817 = vmatpush1.msra.mxu0 0.0
        %1818 = vmatprep.subr.mxu0 0.0
        %1819 = vmatpush1.msra.mxu0 0.0
        %1820 = vmatprep.subr.mxu0 0.0
        %1821 = vmatpush1.msra.mxu0 0.0
        %1822 = vmatprep.subr.mxu0 0.0
        %1823 = vmatpush1.msra.mxu0 0.0
        %1824 = vmatprep.subr.mxu0 0.0
        %1825 = vmatpush1.msra.mxu0 0.0
        %1826 = vmatprep.subr.mxu0 0.0
        %1827 = vmatpush1.msra.mxu0 0.0
        %1828 = vmatprep.subr.mxu0 0.0
        %1829 = vmatpush1.msra.mxu0 0.0
        %1830 = vmatprep.subr.mxu0 0.0
        %1831 = vmatpush1.msra.mxu0 0.0
        %1832 = vmatprep.subr.mxu0 0.0
        %1833 = vmatpush1.msra.mxu0 0.0
        %1834 = vmatprep.subr.mxu0 0.0
        %1835 = vmatpush1.msra.mxu0 0.0
        %1836 = vmatprep.subr.mxu0 0.0
        %1837 = vmatpush1.msra.mxu0 0.0
        %1838 = vmatprep.subr.mxu0 0.0
        %1839 = vmatpush1.msra.mxu0 0.0
        %1840 = vmatprep.subr.mxu0 0.0
        %1841 = vmatpush1.msra.mxu0 0.0
        %1842 = vmatprep.subr.mxu0 0.0
        %1843 = vmatpush1.msra.mxu0 0.0
        %1844 = vmatprep.subr.mxu0 0.0
        %1845 = vmatpush1.msra.mxu0 0.0
        %1846 = vmatprep.subr.mxu0 0.0
        %1847 = vmatpush1.msra.mxu0 0.0
        %1848 = vmatprep.subr.mxu0 0.0
        %1849 = vmatpush1.msra.mxu0 0.0
        %1850 = vmatprep.subr.mxu0 0.0
        %1851 = vmatpush1.msra.mxu0 0.0
        %1852 = vmatprep.mubr.f32.mxu0 0.0
        %1853 = vmatmul.mubr.f32.gmra.mrb[0].mxu0 %v254
        %v1854 = vpop.f32.mrb[0].mxu0
        %v1855 = vadd.f32 0.0, %v1854
        %v1856 = vpop.f32.mrb[0].mxu0
        %1857 = vdwg.mxu0
        %v1859 = vsel %vm474, %v1705, 0
        %v1862 = vsel %vm474, %v1780, 0
        %1864 = vmatprep.subr.mxu0 0.0
        %1865 = vmatpush1.xpose.msra.mxu0 %v1862
        %1866 = vmatprep.subr.mxu0 0.0
        %1867 = vmatpush1.xpose.msra.mxu0 0.0
        %1868 = vmatprep.subr.mxu0 0.0
        %1869 = vmatpush1.xpose.msra.mxu0 0.0
        %1870 = vmatprep.subr.mxu0 0.0
        %1871 = vmatpush1.xpose.msra.mxu0 0.0
        %1872 = vmatprep.subr.mxu0 0.0
        %1873 = vmatpush1.xpose.msra.mxu0 0.0
        %1874 = vmatprep.subr.mxu0 0.0
        %1875 = vmatpush1.xpose.msra.mxu0 0.0
        %1876 = vmatprep.subr.mxu0 0.0
        %1877 = vmatpush1.xpose.msra.mxu0 0.0
        %1878 = vmatprep.subr.mxu0 0.0
        %1879 = vmatpush1.xpose.msra.mxu0 0.0
        %1880 = vmatprep.subr.mxu0 0.0
        %1881 = vmatpush1.xpose.msra.mxu0 0.0
        %1882 = vmatprep.subr.mxu0 0.0
        %1883 = vmatpush1.xpose.msra.mxu0 0.0
        %1884 = vmatprep.subr.mxu0 0.0
        %1885 = vmatpush1.xpose.msra.mxu0 0.0
        %1886 = vmatprep.subr.mxu0 0.0
        %1887 = vmatpush1.xpose.msra.mxu0 0.0
        %1888 = vmatprep.subr.mxu0 0.0
        %1889 = vmatpush1.xpose.msra.mxu0 0.0
        %1890 = vmatprep.subr.mxu0 0.0
        %1891 = vmatpush1.xpose.msra.mxu0 0.0
        %1892 = vmatprep.subr.mxu0 0.0
        %1893 = vmatpush1.xpose.msra.mxu0 0.0
        %1894 = vmatprep.subr.mxu0 0.0
        %1895 = vmatpush1.xpose.msra.mxu0 0.0
        %1896 = vmatprep.subr.mxu0 0.0
        %1897 = vmatpush1.xpose.msra.mxu0 0.0
        %1898 = vmatprep.subr.mxu0 0.0
        %1899 = vmatpush1.xpose.msra.mxu0 0.0
        %1900 = vmatprep.subr.mxu0 0.0
        %1901 = vmatpush1.xpose.msra.mxu0 0.0
        %1902 = vmatprep.subr.mxu0 0.0
        %1903 = vmatpush1.xpose.msra.mxu0 0.0
        %1904 = vmatprep.subr.mxu0 0.0
        %1905 = vmatpush1.xpose.msra.mxu0 0.0
        %1906 = vmatprep.subr.mxu0 0.0
        %1907 = vmatpush1.xpose.msra.mxu0 0.0
        %1908 = vmatprep.subr.mxu0 0.0
        %1909 = vmatpush1.xpose.msra.mxu0 0.0
        %1910 = vmatprep.subr.mxu0 0.0
        %1911 = vmatpush1.xpose.msra.mxu0 0.0
        %1912 = vmatprep.subr.mxu0 0.0
        %1913 = vmatpush1.xpose.msra.mxu0 0.0
        %1914 = vmatprep.subr.mxu0 0.0
        %1915 = vmatpush1.xpose.msra.mxu0 0.0
        %1916 = vmatprep.subr.mxu0 0.0
        %1917 = vmatpush1.xpose.msra.mxu0 0.0
        %1918 = vmatprep.subr.mxu0 0.0
        %1919 = vmatpush1.xpose.msra.mxu0 0.0
        %1920 = vmatprep.subr.mxu0 0.0
        %1921 = vmatpush1.xpose.msra.mxu0 0.0
        %1922 = vmatprep.subr.mxu0 0.0
        %1923 = vmatpush1.xpose.msra.mxu0 0.0
        %1924 = vmatprep.subr.mxu0 0.0
        %1925 = vmatpush1.xpose.msra.mxu0 0.0
        %1926 = vmatprep.subr.mxu0 0.0
        %1927 = vmatpush1.xpose.msra.mxu0 0.0
        %1928 = vmatprep.mubr.f32.mxu0 0.0
        %1929 = vmatmul.mubr.f32.gmra.mrb[0].mxu0 %v1859
        %v1930 = vpop.f32.mrb[0].mxu0
        %v1931 = vadd.f32 0.0, %v1930
        %v1932 = vpop.f32.mrb[0].mxu0
        %1933 = vdwg.mxu0
        %v1934 = vmax.f32 %v1931, 0.0
        %v1935 = vsel %vm474, %v1934, -inf
        %1936 = vmax.xlane.f32.xlu0 %v1935
        %v1937 = vpop.xlane.xlu0 %1936
        %v1938 = vsub.f32 %v1934, %v1937
        %v1939 = vmul.f32 %v1938, 1.442695
        %v1940 = vpow.pop %v1939
        %v1941 = vsel %vm474, %v1940, 0.0
        %1942 = vadd.xlane.f32.xlu0 %v1941
        %v1943 = vpop.xlane.xlu0 %1942
        %v1944 = vrcp.pop %v1943
        %v1945 = vmul.f32 %v1940, %v1944
        %v1947 = vsel %vm474, %v1945, 0
        %1949 = vmatprep.subr.mxu0 0.0
        %1950 = vmatpush1.msra.mxu0 %v1855
        %1951 = vmatprep.subr.mxu0 0.0
        %1952 = vmatpush1.msra.mxu0 0.0
        %1953 = vmatprep.subr.mxu0 0.0
        %1954 = vmatpush1.msra.mxu0 0.0
        %1955 = vmatprep.subr.mxu0 0.0
        %1956 = vmatpush1.msra.mxu0 0.0
        %1957 = vmatprep.subr.mxu0 0.0
        %1958 = vmatpush1.msra.mxu0 0.0
        %1959 = vmatprep.subr.mxu0 0.0
        %1960 = vmatpush1.msra.mxu0 0.0
        %1961 = vmatprep.subr.mxu0 0.0
        %1962 = vmatpush1.msra.mxu0 0.0
        %1963 = vmatprep.subr.mxu0 0.0
        %1964 = vmatpush1.msra.mxu0 0.0
        %1965 = vmatprep.subr.mxu0 0.0
        %1966 = vmatpush1.msra.mxu0 0.0
        %1967 = vmatprep.subr.mxu0 0.0
        %1968 = vmatpush1.msra.mxu0 0.0
        %1969 = vmatprep.subr.mxu0 0.0
        %1970 = vmatpush1.msra.mxu0 0.0
        %1971 = vmatprep.subr.mxu0 0.0
        %1972 = vmatpush1.msra.mxu0 0.0
        %1973 = vmatprep.subr.mxu0 0.0
        %1974 = vmatpush1.msra.mxu0 0.0
        %1975 = vmatprep.subr.mxu0 0.0
        %1976 = vmatpush1.msra.mxu0 0.0
        %1977 = vmatprep.subr.mxu0 0.0
        %1978 = vmatpush1.msra.mxu0 0.0
        %1979 = vmatprep.subr.mxu0 0.0
        %1980 = vmatpush1.msra.mxu0 0.0
        %1981 = vmatprep.subr.mxu0 0.0
        %1982 = vmatpush1.msra.mxu0 0.0
        %1983 = vmatprep.subr.mxu0 0.0
        %1984 = vmatpush1.msra.mxu0 0.0
        %1985 = vmatprep.subr.mxu0 0.0
        %1986 = vmatpush1.msra.mxu0 0.0
        %1987 = vmatprep.subr.mxu0 0.0
        %1988 = vmatpush1.msra.mxu0 0.0
        %1989 = vmatprep.subr.mxu0 0.0
        %1990 = vmatpush1.msra.mxu0 0.0
        %1991 = vmatprep.subr.mxu0 0.0
        %1992 = vmatpush1.msra.mxu0 0.0
        %1993 = vmatprep.subr.mxu0 0.0
        %1994 = vmatpush1.msra.mxu0 0.0
        %1995 = vmatprep.subr.mxu0 0.0
        %1996 = vmatpush1.msra.mxu0 0.0
        %1997 = vmatprep.subr.mxu0 0.0
        %1998 = vmatpush1.msra.mxu0 0.0
        %1999 = vmatprep.subr.mxu0 0.0
        %2000 = vmatpush1.msra.mxu0 0.0
        %2001 = vmatprep.subr.mxu0 0.0
        %2002 = vmatpush1.msra.mxu0 0.0
        %2003 = vmatprep.subr.mxu0 0.0
        %2004 = vmatpush1.msra.mxu0 0.0
        %2005 = vmatprep.subr.mxu0 0.0
        %2006 = vmatpush1.msra.mxu0 0.0
        %2007 = vmatprep.subr.mxu0 0.0
        %2008 = vmatpush1.msra.mxu0 0.0
        %2009 = vmatprep.subr.mxu0 0.0
        %2010 = vmatpush1.msra.mxu0 0.0
        %2011 = vmatprep.subr.mxu0 0.0
        %2012 = vmatpush1.msra.mxu0 0.0
        %2013 = vmatprep.mubr.f32.mxu0 0.0
        %2014 = vmatmul.mubr.f32.gmra.mrb[0].mxu0 %v1947
        %v2015 = vpop.f32.mrb[0].mxu0
        %v2016 = vadd.f32 0.0, %v2015
        %v2017 = vpop.f32.mrb[0].mxu0
        %2018 = vdwg.mxu0
        %s2019 = scalar_lea.vmem %s4, 24
        %v2020 = vld [vmem:[%s2019] sm:$0xff]
        %v2022 = vsel %vm474, %v2016, 0
        %2024 = vmatprep.subr.mxu0 0.0
        %2025 = vmatpush1.msra.mxu0 %v2020
        %2026 = vmatprep.subr.mxu0 0.0
        %2027 = vmatpush1.msra.mxu0 0.0
        %2028 = vmatprep.subr.mxu0 0.0
        %2029 = vmatpush1.msra.mxu0 0.0
        %2030 = vmatprep.subr.mxu0 0.0
        %2031 = vmatpush1.msra.mxu0 0.0
        %2032 = vmatprep.subr.mxu0 0.0
        %2033 = vmatpush1.msra.mxu0 0.0
        %2034 = vmatprep.subr.mxu0 0.0
        %2035 = vmatpush1.msra.mxu0 0.0
        %2036 = vmatprep.subr.mxu0 0.0
        %2037 = vmatpush1.msra.mxu0 0.0
        %2038 = vmatprep.subr.mxu0 0.0
        %2039 = vmatpush1.msra.mxu0 0.0
        %2040 = vmatprep.subr.mxu0 0.0
        %2041 = vmatpush1.msra.mxu0 0.0
        %2042 = vmatprep.subr.mxu0 0.0
        %2043 = vmatpush1.msra.mxu0 0.0
        %2044 = vmatprep.subr.mxu0 0.0
        %2045 = vmatpush1.msra.mxu0 0.0
        %2046 = vmatprep.subr.mxu0 0.0
        %2047 = vmatpush1.msra.mxu0 0.0
        %2048 = vmatprep.subr.mxu0 0.0
        %2049 = vmatpush1.msra.mxu0 0.0
        %2050 = vmatprep.subr.mxu0 0.0
        %2051 = vmatpush1.msra.mxu0 0.0
        %2052 = vmatprep.subr.mxu0 0.0
        %2053 = vmatpush1.msra.mxu0 0.0
        %2054 = vmatprep.subr.mxu0 0.0
        %2055 = vmatpush1.msra.mxu0 0.0
        %2056 = vmatprep.subr.mxu0 0.0
        %2057 = vmatpush1.msra.mxu0 0.0
        %2058 = vmatprep.subr.mxu0 0.0
        %2059 = vmatpush1.msra.mxu0 0.0
        %2060 = vmatprep.subr.mxu0 0.0
        %2061 = vmatpush1.msra.mxu0 0.0
        %2062 = vmatprep.subr.mxu0 0.0
        %2063 = vmatpush1.msra.mxu0 0.0
        %2064 = vmatprep.subr.mxu0 0.0
        %2065 = vmatpush1.msra.mxu0 0.0
        %2066 = vmatprep.subr.mxu0 0.0
        %2067 = vmatpush1.msra.mxu0 0.0
        %2068 = vmatprep.subr.mxu0 0.0
        %2069 = vmatpush1.msra.mxu0 0.0
        %2070 = vmatprep.subr.mxu0 0.0
        %2071 = vmatpush1.msra.mxu0 0.0
        %2072 = vmatprep.subr.mxu0 0.0
        %2073 = vmatpush1.msra.mxu0 0.0
        %2074 = vmatprep.subr.mxu0 0.0
        %2075 = vmatpush1.msra.mxu0 0.0
        %2076 = vmatprep.subr.mxu0 0.0
        %2077 = vmatpush1.msra.mxu0 0.0
        %2078 = vmatprep.subr.mxu0 0.0
        %2079 = vmatpush1.msra.mxu0 0.0
        %2080 = vmatprep.subr.mxu0 0.0
        %2081 = vmatpush1.msra.mxu0 0.0
        %2082 = vmatprep.subr.mxu0 0.0
        %2083 = vmatpush1.msra.mxu0 0.0
        %2084 = vmatprep.subr.mxu0 0.0
        %2085 = vmatpush1.msra.mxu0 0.0
        %2086 = vmatprep.subr.mxu0 0.0
        %2087 = vmatpush1.msra.mxu0 0.0
        %2088 = vmatprep.mubr.f32.mxu0 0.0
        %2089 = vmatmul.mubr.f32.gmra.mrb[0].mxu0 %v2022
        %v2090 = vpop.f32.mrb[0].mxu0
        %v2091 = vadd.f32 0.0, %v2090
        %v2092 = vpop.f32.mrb[0].mxu0
        %2093 = vdwg.mxu0
        %v2094 = vadd.f32 %v1632, %v2091
        %v2095 = vld [vmem:[%s5] sm:$0x1]
        %v2097 = vlaneseq
        %v2098 = vshrl.u32 %v2097, 7
        %v2099 = vsub.s32 0, %v2098
        %v2100 = vrot.slane %v2095, %v2099
        %v2102 = vadd.f32 %v2094, %v2100
        %2103 = vst [vmem:[%s242] sm:$0xff] %v2102
        %s2104 = sand.u32 %s159, 1
        %s2105 = scalar_lea.sflag [#allocation3], %s2104
        %s2106 = sand.u32 %s159, 1
        %s2107 = smul.addr %s2106, 8
        %s2108 = scalar_lea.vmem [#allocation2], %s2107
        // Predicated region
        $region45: #{tpu_custom_call.1} parent=43 // pred_check
          %p2109 = pneg %p169
        $region46: #{tpu_custom_call.1} parent=43 // pred_check_branch
          %2111 = sbr.rel (%p2109) target = $region48
        $region47: #{tpu_custom_call.1} parent=43 // pred_region
          %s2113 = ssub.s32 128, 128
          %2114 = vsyncadd %s2105, %s2113
          %s2115 = smul.addr %s20, 128
          %s2116 = scalar_lea.hbm %s6, %s2115
          %s2118 = sshll.u32 %s2108, 4
          %s2119 = int_to_ptr.vmem [resolvable:$true] %s2118
          %2121 = dma.vmem_to_hbm [thread:$0]  %s2119, 128, %s2116, %s2105
        $region48: #{tpu_custom_call.1} parent=43 // pred_fallthru
          _
      $region44: #{tpu_custom_call.1} parent=5 // pred_fallthru
        _
      %p2122 = scmp.le.s32.totalorder 2, %s15
      // Predicated region
      $region49: #{tpu_custom_call.1} parent=5 // pred_check
        %p2123 = pneg %p2122
      $region50: #{tpu_custom_call.1} parent=5 // pred_check_branch
        %2125 = sbr.rel (%p2123) target = $region52
      $region51: #{tpu_custom_call.1} parent=5 // pred_region
        %s2126 = ssub.s32 %s15, 2
        // Predicated region
        $region53: #{tpu_custom_call.1} parent=51 // pred_check
          %p2127 = pneg %p175
        $region54: #{tpu_custom_call.1} parent=51 // pred_check_branch
          %2129 = sbr.rel (%p2127) target = $region56
        $region55: #{tpu_custom_call.1} parent=51 // pred_region
          %s2130 = sand.u32 %s160, 1
          %s2131 = scalar_lea.sflag [#allocation3], %s2130
          %s2132 = sand.u32 %s160, 1
          %s2133 = smul.addr %s2132, 8
          %s2134 = scalar_lea.vmem [#allocation2], %s2133
          %2135 = dma.done %s2131, 128
        $region56: #{tpu_custom_call.1} parent=51 // pred_fallthru
          _
      $region52: #{tpu_custom_call.1} parent=5 // pred_fallthru
        _
    $region6: #{tpu_custom_call.1} parent=1 // loop_footer
      %s19 = sadd.s32 1, %s15
    $region7: #{tpu_custom_call.1} parent=1 // loop_footer_branch
      %14 = sbr.rel target = $region3
    $region8: #{tpu_custom_call.1} parent=1 // loop_exit
      _
    %2136 = vsyncpa [#allocation3], 1
    %s2137 = scalar_lea.sflag [#allocation3], 1
    %2138 = vsyncpa %s2137, 1

</llo_original>
